<compile_context>
chip_gen: v7x
topology: tpu7x:2x2x1
jax: 0.10.0
libtpu: 0.0.40
codegen_flags: <defaults>
</compile_context>

<pallas_src>
import math
import functools

import jax
import jax.numpy as jnp
from jax.experimental import pallas as pl
from jax.experimental.pallas import tpu as pltpu

EPS_LN = 1e-5
EPS_BN = 1e-5

# bf16 into the MXU, f32 accumulation; vector/stat math stays f32.
MATMUL_DTYPE = jnp.bfloat16

# Explicit scoped-VMEM budget: inside v7x's 64 MiB physical VMEM, above the
# 32 MiB scoped default on all generations.
VMEM_LIMIT = 48 * 1024 * 1024

_SQRT_2_OVER_PI = math.sqrt(2.0 / math.pi)


def _gelu(x):
    # TODO(synk): PyTorch nn.GELU() uses exact erf; tanh-approx GELU used here
    # so the transcendental lands on the EUP slot (max abs error ~1e-3).
    return 0.5 * x * (1.0 + jnp.tanh(_SQRT_2_OVER_PI * (x + 0.044715 * x * x * x)))


def _layernorm(v, g, b):
    mu = jnp.mean(v, axis=-1, keepdims=True)
    var = jnp.mean(jnp.square(v - mu), axis=-1, keepdims=True)
    return (v - mu) * jax.lax.rsqrt(var + EPS_LN) * g + b


def _mm(a, b):
    # MXU matmul: bf16 operands, f32 accumulation.
    return jnp.dot(a.astype(MATMUL_DTYPE), b, preferred_element_type=jnp.float32)


# ----------------------------------------------------------------------------
# Fused Pallas kernel: patch-embed -> encoder stack -> output projection
# ----------------------------------------------------------------------------

def _vit_fused_kernel(num_heads,
                      patches_ref, w_embed, pos_bias,
                      ln1_g, ln1_b, wqkv, bqkv, wo, bo,
                      ln2_g, ln2_b, w1, b1, w2, b2,
                      w_out, b_out,
                      o_ref, tok_ref, attn_ref):
    """grid = (B, num_blocks); batch 'parallel', layer 'arbitrary'.

    Tokens stay resident in `tok_ref` (VMEM scratch) across the layer axis;
    per-layer weights stream in via their BlockSpecs (the layer-invariant
    inputs keep a constant block index and are fetched once per batch step).
    """
    L, E = tok_ref.shape
    hd = E // num_heads
    scale = 1.0 / math.sqrt(hd)
    layer = pl.program_id(1)

    # ---- patch embedding (+ folded BN) + position embedding (layer 0 only) --
    @pl.when(layer == 0)
    def _():
        tok_ref[...] = _mm(patches_ref[...], w_embed[...]) + pos_bias[...]

    x = tok_ref[...]

    # ---- multi-head self-attention branch -----------------------------------
    y = _layernorm(x, ln1_g[...], ln1_b[...])
    qkv = _mm(y, wqkv[...]) + bqkv[...]
    q = qkv[:, :E] * scale
    k = qkv[:, E:2 * E]
    v = qkv[:, 2 * E:]

    # Per-head scores/softmax/context; each head's context is written into one
    # (L, E) VMEM buffer so the output projection below is a single full-E
    # contraction on the MXU (instead of num_heads K=hd matmuls).
    # TODO(synk): at production head counts switch to a batched (H, L, hd)
    # dot_general instead of the static head loop.
    for h in range(num_heads):
        sl = slice(h * hd, (h + 1) * hd)
        s = jax.lax.dot_general(
            q[:, sl].astype(MATMUL_DTYPE), k[:, sl].astype(MATMUL_DTYPE),
            (((1,), (1,)), ((), ())), preferred_element_type=jnp.float32)
        s = s - jnp.max(s, axis=-1, keepdims=True)
        p = jnp.exp(s)
        p = p * pl.reciprocal(jnp.sum(p, axis=-1, keepdims=True), approx=True)
        attn_ref[:, sl] = jnp.dot(p.astype(MATMUL_DTYPE),
                                  v[:, sl].astype(MATMUL_DTYPE),
                                  preferred_element_type=jnp.float32)

    x = x + (_mm(attn_ref[...], wo[...]) + bo[...])

    # ---- MLP branch ----------------------------------------------------------
    z = _layernorm(x, ln2_g[...], ln2_b[...])
    h1 = _gelu(_mm(z, w1[...]) + b1[...])
    x = x + (_mm(h1, w2[...]) + b2[...])

    tok_ref[...] = x

    # ---- output projection (last layer only) ---------------------------------
    @pl.when(layer == pl.num_programs(1) - 1)
    def _():
        o_ref[...] = _mm(x, w_out[...]) + b_out[...]


# ----------------------------------------------------------------------------
# Forward pass wrapper
# ----------------------------------------------------------------------------

_BLOCK_PARAM_ORDER = ("ln1_g", "ln1_b", "wqkv", "bqkv", "wo", "bo",
                      "ln2_g", "ln2_b", "w1", "b1", "w2", "b2")
_MATMUL_WEIGHTS = ("wqkv", "wo", "w1", "w2")


def vit_seg_forward(x, params, *, patch_size, num_heads):
    B, C, H, W = x.shape
    P = patch_size
    E = params["w_embed"].shape[1]
    d_out = params["w_out"].shape[1]
    out_channels = d_out // (P * P)
    Hp, Wp = H // P, W // P
    L = Hp * Wp
    d_in = C * P * P

    # 1) Fold eval-mode BatchNorm2d into the patch-embedding weights (exact):
    #    x_bn = x*s_c + t_c (per channel), unfold is a permutation, so
    #    emb = patches @ (diag(s_feat) W) + (t_feat @ W + b).
    s = params["bn_gamma"] / jnp.sqrt(params["bn_var"] + EPS_BN)        # (C,)
    t = params["bn_beta"] - params["bn_mean"] * s                       # (C,)
    s_feat = jnp.repeat(s, P * P)                                       # (d_in,)
    t_feat = jnp.repeat(t, P * P)                                       # (d_in,)
    w_embed = (params["w_embed"] * s_feat[:, None]).astype(MATMUL_DTYPE)
    b_embed = params["b_embed"] + t_feat[None, :] @ params["w_embed"]   # (1, E)
    pos_bias = params["pos"] + b_embed                                  # (L, E)

    # 2) Unfold (kernel=stride=P, channel-major feature order) — layout glue.
    patches = (x.reshape(B, C, Hp, P, Wp, P)
                 .transpose(0, 2, 4, 1, 3, 5)
                 .reshape(B, L, d_in))

    # 3) Per-layer weights stacked on a leading layer axis, streamed by the
    #    'arbitrary' grid axis of the fused kernel.
    blocks = params["blocks"]
    num_blocks = len(blocks)
    stacked = []
    for name in _BLOCK_PARAM_ORDER:
        w = jnp.stack([blk[name] for blk in blocks], axis=0)
        if name in _MATMUL_WEIGHTS:
            w = w.astype(MATMUL_DTYPE)
        stacked.append(w)
    w_out = params["w_out"].astype(MATMUL_DTYPE)

    # 4) One fused pallas_call for the whole network, grid=(B, num_blocks).
    in_specs = [
        pl.BlockSpec((None, L, d_in), lambda b, l: (b, 0, 0)),   # patches
        pl.BlockSpec((d_in, E), lambda b, l: (0, 0)),            # w_embed (BN-folded)
        pl.BlockSpec((L, E), lambda b, l: (0, 0)),               # pos + embed bias
    ]
    for w in stacked:
        rest = w.shape[1:]
        in_specs.append(pl.BlockSpec((None,) + rest, lambda b, l: (l, 0, 0)))
    in_specs += [
        pl.BlockSpec((E, d_out), lambda b, l: (0, 0)),           # w_out
        pl.BlockSpec((1, d_out), lambda b, l: (0, 0)),           # b_out
    ]

    proj = pl.pallas_call(
        functools.partial(_vit_fused_kernel, num_heads),
        out_shape=jax.ShapeDtypeStruct((B, L, d_out), jnp.float32),
        grid=(B, num_blocks),
        in_specs=in_specs,
        out_specs=pl.BlockSpec((None, L, d_out), lambda b, l: (b, 0, 0)),
        scratch_shapes=[pltpu.VMEM((L, E), jnp.float32),   # resident tokens
                        pltpu.VMEM((L, E), jnp.float32)],  # head contexts
        compiler_params=pltpu.CompilerParams(
            dimension_semantics=("parallel", "arbitrary"),
            vmem_limit_bytes=VMEM_LIMIT),
    )(patches, w_embed, pos_bias, *stacked, w_out, params["b_out"])

    # 5) Fold back to NCHW (non-overlapping, pure placement) — layout glue.
    y = (proj.reshape(B, Hp, Wp, out_channels, P, P)
             .transpose(0, 3, 1, 4, 2, 5)
             .reshape(B, out_channels, H, W))
    return y


# ----------------------------------------------------------------------------
# Deterministic parameter initialization (synthetic weights)
# ----------------------------------------------------------------------------

def init_params(key, *, image_size, patch_size, in_channels, out_channels,
                embed_size, num_blocks):
    P = patch_size
    E = embed_size
    L = (image_size // P) ** 2
    d_in = in_channels * P * P
    d_out = P * P * out_channels

    keys = iter(jax.random.split(key, 32 + 16 * num_blocks))

    def nrm(shape, scale=0.02):
        return scale * jax.random.normal(next(keys), shape, jnp.float32)

    params = {
        "bn_gamma": 1.0 + nrm((in_channels,), 0.1),
        "bn_beta": nrm((in_channels,), 0.1),
        "bn_mean": jnp.zeros((in_channels,), jnp.float32),
        "bn_var": jnp.ones((in_channels,), jnp.float32),
        "w_embed": nrm((d_in, E)),
        "b_embed": nrm((1, E)),
        "pos": jax.random.normal(next(keys), (L, E), jnp.float32),  # torch.randn
        "w_out": nrm((E, d_out)),
        "b_out": nrm((1, d_out)),
        "blocks": [],
    }
    for _ in range(num_blocks):
        params["blocks"].append({
            "ln1_g": 1.0 + nrm((1, E), 0.1),
            "ln1_b": nrm((1, E), 0.1),
            "wqkv": nrm((E, 3 * E)),
            "bqkv": nrm((1, 3 * E)),
            "wo": nrm((E, E)),
            "bo": nrm((1, E)),
            "ln2_g": 1.0 + nrm((1, E), 0.1),
            "ln2_b": nrm((1, E), 0.1),
            "w1": nrm((E, 4 * E)),
            "b1": nrm((1, 4 * E)),
            "w2": nrm((4 * E, E)),
            "b2": nrm((1, E)),
        })
    return params


# ----------------------------------------------------------------------------

if __name__ == "__main__":
    image_size, patch_size = 16, 4
    in_channels, out_channels = 4, 3
    embed_size, num_blocks, num_heads = 32, 2, 4
    dropout = 0.0      # eval mode: dropout is identity
    batch = 2

    key = jax.random.PRNGKey(0)
    kx, kp = jax.random.split(key)
    x = jax.random.normal(kx, (batch, in_channels, image_size, image_size),
                          jnp.float32)
    params = init_params(kp, image_size=image_size, patch_size=patch_size,
                         in_channels=in_channels, out_channels=out_channels,
                         embed_size=embed_size, num_blocks=num_blocks)

    fwd = jax.jit(functools.partial(vit_seg_forward,
                                    patch_size=patch_size,
                                    num_heads=num_heads))
    out = fwd(x, params)
    out = jax.block_until_ready(out)

    assert out.shape == (batch, out_channels, image_size, image_size), out.shape
    assert bool(jnp.all(jnp.isfinite(out)))
    print("KERNEL_OK")
</pallas_src>

<mosaic_0001>
module attributes {stable_mosaic.version = 11 : i64} {
  func.func @_vit_fused_kernel(%arg0: i32, %arg1: i32, %arg2: memref<1x16x64xf32, #tpu.memory_space<vmem>>, %arg3: memref<64x32xbf16, #tpu.memory_space<vmem>>, %arg4: memref<16x32xf32, #tpu.memory_space<vmem>>, %arg5: memref<1x1x32xf32, #tpu.memory_space<vmem>>, %arg6: memref<1x1x32xf32, #tpu.memory_space<vmem>>, %arg7: memref<1x32x96xbf16, #tpu.memory_space<vmem>>, %arg8: memref<1x1x96xf32, #tpu.memory_space<vmem>>, %arg9: memref<1x32x32xbf16, #tpu.memory_space<vmem>>, %arg10: memref<1x1x32xf32, #tpu.memory_space<vmem>>, %arg11: memref<1x1x32xf32, #tpu.memory_space<vmem>>, %arg12: memref<1x1x32xf32, #tpu.memory_space<vmem>>, %arg13: memref<1x32x128xbf16, #tpu.memory_space<vmem>>, %arg14: memref<1x1x128xf32, #tpu.memory_space<vmem>>, %arg15: memref<1x128x32xbf16, #tpu.memory_space<vmem>>, %arg16: memref<1x1x32xf32, #tpu.memory_space<vmem>>, %arg17: memref<32x48xbf16, #tpu.memory_space<vmem>>, %arg18: memref<1x48xf32, #tpu.memory_space<vmem>>, %arg19: memref<1x16x48xf32, #tpu.memory_space<vmem>>, %arg20: memref<16x32xf32, #tpu.memory_space<vmem>>, %arg21: memref<16x32xf32, #tpu.memory_space<vmem>>) attributes {dimension_semantics = [#tpu.dimension_semantics<parallel>, #tpu.dimension_semantics<arbitrary>], iteration_bounds = array<i64: 2, 2>, scalar_prefetch = 0 : i64, scratch_operands = 2 : i64, tpu.core_type = #tpu.core_type<tc>, window_params = [{transform_indices = @transform_0, window_bounds = array<i64: 1, 16, 64>}, {pipeline_mode = #tpu.pipeline_mode<synchronous>, transform_indices = @transform_1, window_bounds = array<i64: 64, 32>}, {pipeline_mode = #tpu.pipeline_mode<synchronous>, transform_indices = @transform_2, window_bounds = array<i64: 16, 32>}, {transform_indices = @transform_3, window_bounds = array<i64: 1, 1, 32>}, {transform_indices = @transform_4, window_bounds = array<i64: 1, 1, 32>}, {transform_indices = @transform_5, window_bounds = array<i64: 1, 32, 96>}, {transform_indices = @transform_6, window_bounds = array<i64: 1, 1, 96>}, {transform_indices = @transform_7, window_bounds = array<i64: 1, 32, 32>}, {transform_indices = @transform_8, window_bounds = array<i64: 1, 1, 32>}, {transform_indices = @transform_9, window_bounds = array<i64: 1, 1, 32>}, {transform_indices = @transform_10, window_bounds = array<i64: 1, 1, 32>}, {transform_indices = @transform_11, window_bounds = array<i64: 1, 32, 128>}, {transform_indices = @transform_12, window_bounds = array<i64: 1, 1, 128>}, {transform_indices = @transform_13, window_bounds = array<i64: 1, 128, 32>}, {transform_indices = @transform_14, window_bounds = array<i64: 1, 1, 32>}, {pipeline_mode = #tpu.pipeline_mode<synchronous>, transform_indices = @transform_15, window_bounds = array<i64: 32, 48>}, {pipeline_mode = #tpu.pipeline_mode<synchronous>, transform_indices = @transform_16, window_bounds = array<i64: 1, 48>}, {transform_indices = @transform_17, window_bounds = array<i64: 1, 16, 48>}]} {
    %c0_i32 = arith.constant 0 : i32
    %0 = arith.cmpi eq, %arg1, %c0_i32 : i32
    %1 = arith.extui %0 : i1 to i32
    %c0_i32_0 = arith.constant 0 : i32
    %2 = arith.cmpi ne, %1, %c0_i32_0 : i32
    scf.if %2 {
      %c0_82 = arith.constant 0 : index
      %c0_83 = arith.constant 0 : index
      %c0_84 = arith.constant 0 : index
      %193 = vector.load %arg2[%c0_82, %c0_83, %c0_84] : memref<1x16x64xf32, #tpu.memory_space<vmem>>, vector<1x16x64xf32>
      %194 = vector.shape_cast %193 : vector<1x16x64xf32> to vector<16x64xf32>
      %c0_85 = arith.constant 0 : index
      %c0_86 = arith.constant 0 : index
      %195 = vector.load %arg3[%c0_85, %c0_86] : memref<64x32xbf16, #tpu.memory_space<vmem>>, vector<64x32xbf16>
      %196 = arith.truncf %194 : vector<16x64xf32> to vector<16x64xbf16>
      %cst_87 = arith.constant dense<0.000000e+00> : vector<16x32xf32>
      %197 = tpu.matmul %196, %195, %cst_87 {dimension_numbers = #tpu.dot_dimension_numbers<[1], [0], [0], [1], [0, 0, 1, 1], [], []>} : vector<16x64xbf16>, vector<64x32xbf16>, vector<16x32xf32> -> vector<16x32xf32>
      %c0_88 = arith.constant 0 : index
      %c0_89 = arith.constant 0 : index
      %198 = vector.load %arg4[%c0_88, %c0_89] : memref<16x32xf32, #tpu.memory_space<vmem>>, vector<16x32xf32>
      %199 = arith.addf %197, %198 : vector<16x32xf32>
      %c0_90 = arith.constant 0 : index
      %c0_91 = arith.constant 0 : index
      %200 = vector.load %arg20[%c0_90, %c0_91] : memref<16x32xf32, #tpu.memory_space<vmem>>, vector<16x32xf32>
      tpu.vector_store %arg20[%c0_90, %c0_91], %199 {strides = array<i32>} : memref<16x32xf32, #tpu.memory_space<vmem>>, vector<16x32xf32>,
    } else {
    }
    %c0 = arith.constant 0 : index
    %c0_1 = arith.constant 0 : index
    %3 = vector.load %arg20[%c0, %c0_1] : memref<16x32xf32, #tpu.memory_space<vmem>>, vector<16x32xf32>
    %c0_2 = arith.constant 0 : index
    %c0_3 = arith.constant 0 : index
    %c0_4 = arith.constant 0 : index
    %4 = vector.load %arg5[%c0_2, %c0_3, %c0_4] : memref<1x1x32xf32, #tpu.memory_space<vmem>>, vector<1x1x32xf32>
    %5 = vector.shape_cast %4 : vector<1x1x32xf32> to vector<1x32xf32>
    %c0_5 = arith.constant 0 : index
    %c0_6 = arith.constant 0 : index
    %c0_7 = arith.constant 0 : index
    %6 = vector.load %arg6[%c0_5, %c0_6, %c0_7] : memref<1x1x32xf32, #tpu.memory_space<vmem>>, vector<1x1x32xf32>
    %7 = vector.shape_cast %6 : vector<1x1x32xf32> to vector<1x32xf32>
    %cst = arith.constant dense<0.000000e+00> : vector<16xf32>
    %8 = vector.multi_reduction <add>, %3, %cst [1] : vector<16x32xf32> to vector<16xf32>
    %9 = vector.shape_cast %8 : vector<16xf32> to vector<16x1xf32>
    %cst_8 = arith.constant 3.200000e+01 : f32
    %10 = vector.broadcast %cst_8 : f32 to vector<16x1xf32>
    %11 = arith.divf %9, %10 : vector<16x1xf32>
    %12 = vector.broadcast %11 : vector<16x1xf32> to vector<16x32xf32>
    %13 = arith.subf %3, %12 : vector<16x32xf32>
    %14 = arith.mulf %13, %13 : vector<16x32xf32>
    %cst_9 = arith.constant dense<0.000000e+00> : vector<16xf32>
    %15 = vector.multi_reduction <add>, %14, %cst_9 [1] : vector<16x32xf32> to vector<16xf32>
    %16 = vector.shape_cast %15 : vector<16xf32> to vector<16x1xf32>
    %cst_10 = arith.constant 3.200000e+01 : f32
    %17 = vector.broadcast %cst_10 : f32 to vector<16x1xf32>
    %18 = arith.divf %16, %17 : vector<16x1xf32>
    %19 = vector.broadcast %11 : vector<16x1xf32> to vector<16x32xf32>
    %20 = arith.subf %3, %19 : vector<16x32xf32>
    %cst_11 = arith.constant 9.99999974E-6 : f32
    %21 = vector.broadcast %cst_11 : f32 to vector<16x1xf32>
    %22 = arith.addf %18, %21 : vector<16x1xf32>
    %23 = math.rsqrt %22 : vector<16x1xf32>
    %24 = vector.broadcast %23 : vector<16x1xf32> to vector<16x32xf32>
    %25 = arith.mulf %20, %24 : vector<16x32xf32>
    %26 = vector.broadcast %5 : vector<1x32xf32> to vector<16x32xf32>
    %27 = arith.mulf %25, %26 : vector<16x32xf32>
    %28 = vector.broadcast %7 : vector<1x32xf32> to vector<16x32xf32>
    %29 = arith.addf %27, %28 : vector<16x32xf32>
    %c0_12 = arith.constant 0 : index
    %c0_13 = arith.constant 0 : index
    %c0_14 = arith.constant 0 : index
    %30 = vector.load %arg7[%c0_12, %c0_13, %c0_14] : memref<1x32x96xbf16, #tpu.memory_space<vmem>>, vector<1x32x96xbf16>
    %31 = vector.shape_cast %30 : vector<1x32x96xbf16> to vector<32x96xbf16>
    %32 = arith.truncf %29 : vector<16x32xf32> to vector<16x32xbf16>
    %cst_15 = arith.constant dense<0.000000e+00> : vector<16x96xf32>
    %33 = tpu.matmul %32, %31, %cst_15 {dimension_numbers = #tpu.dot_dimension_numbers<[1], [0], [0], [1], [0, 0, 1, 1], [], []>} : vector<16x32xbf16>, vector<32x96xbf16>, vector<16x96xf32> -> vector<16x96xf32>
    %c0_16 = arith.constant 0 : index
    %c0_17 = arith.constant 0 : index
    %c0_18 = arith.constant 0 : index
    %34 = vector.load %arg8[%c0_16, %c0_17, %c0_18] : memref<1x1x96xf32, #tpu.memory_space<vmem>>, vector<1x1x96xf32>
    %35 = vector.shape_cast %34 : vector<1x1x96xf32> to vector<1x96xf32>
    %36 = vector.broadcast %35 : vector<1x96xf32> to vector<16x96xf32>
    %37 = arith.addf %33, %36 : vector<16x96xf32>
    %38 = vector.extract_strided_slice %37 {offsets = [0, 0], sizes = [16, 32], strides = [1, 1]} : vector<16x96xf32> to vector<16x32xf32>
    %cst_19 = arith.constant 0.353553385 : f32
    %39 = vector.broadcast %cst_19 : f32 to vector<16x32xf32>
    %40 = arith.mulf %38, %39 : vector<16x32xf32>
    %41 = vector.extract_strided_slice %37 {offsets = [0, 32], sizes = [16, 32], strides = [1, 1]} : vector<16x96xf32> to vector<16x32xf32>
    %42 = vector.extract_strided_slice %37 {offsets = [0, 64], sizes = [16, 32], strides = [1, 1]} : vector<16x96xf32> to vector<16x32xf32>
    %43 = vector.extract_strided_slice %40 {offsets = [0, 0], sizes = [16, 8], strides = [1, 1]} : vector<16x32xf32> to vector<16x8xf32>
    %44 = arith.truncf %43 : vector<16x8xf32> to vector<16x8xbf16>
    %45 = vector.extract_strided_slice %41 {offsets = [0, 0], sizes = [16, 8], strides = [1, 1]} : vector<16x32xf32> to vector<16x8xf32>
    %46 = arith.truncf %45 : vector<16x8xf32> to vector<16x8xbf16>
    %cst_20 = arith.constant dense<0.000000e+00> : vector<16x16xf32>
    %47 = tpu.matmul %44, %46, %cst_20 {dimension_numbers = #tpu.dot_dimension_numbers<[1], [1], [0], [0], [0, 0, 1, 0], [], []>} : vector<16x8xbf16>, vector<16x8xbf16>, vector<16x16xf32> -> vector<16x16xf32>
    %cst_21 = arith.constant dense<0xFF800000> : vector<16xf32>
    %48 = vector.multi_reduction <maximumf>, %47, %cst_21 [1] : vector<16x16xf32> to vector<16xf32>
    %49 = vector.shape_cast %48 : vector<16xf32> to vector<16x1xf32>
    %50 = vector.broadcast %49 : vector<16x1xf32> to vector<16x16xf32>
    %51 = arith.subf %47, %50 : vector<16x16xf32>
    %52 = math.exp %51 : vector<16x16xf32>
    %cst_22 = arith.constant dense<0.000000e+00> : vector<16xf32>
    %53 = vector.multi_reduction <add>, %52, %cst_22 [1] : vector<16x16xf32> to vector<16xf32>
    %54 = vector.shape_cast %53 : vector<16xf32> to vector<16x1xf32>
    %55 = tpu.reciprocal %54 {approx = true} : vector<16x1xf32> -> vector<16x1xf32>
    %56 = vector.broadcast %55 : vector<16x1xf32> to vector<16x16xf32>
    %57 = arith.mulf %52, %56 : vector<16x16xf32>
    %58 = arith.truncf %57 : vector<16x16xf32> to vector<16x16xbf16>
    %59 = vector.extract_strided_slice %42 {offsets = [0, 0], sizes = [16, 8], strides = [1, 1]} : vector<16x32xf32> to vector<16x8xf32>
    %60 = arith.truncf %59 : vector<16x8xf32> to vector<16x8xbf16>
    %cst_23 = arith.constant dense<0.000000e+00> : vector<16x8xf32>
    %61 = tpu.matmul %58, %60, %cst_23 {dimension_numbers = #tpu.dot_dimension_numbers<[1], [0], [0], [1], [0, 0, 1, 1], [], []>} : vector<16x16xbf16>, vector<16x8xbf16>, vector<16x8xf32> -> vector<16x8xf32>
    %c0_24 = arith.constant 0 : index
    %c0_25 = arith.constant 0 : index
    %62 = vector.load %arg21[%c0_24, %c0_25] : memref<16x32xf32, #tpu.memory_space<vmem>>, vector<16x8xf32>
    tpu.vector_store %arg21[%c0_24, %c0_25], %61 {strides = array<i32>} : memref<16x32xf32, #tpu.memory_space<vmem>>, vector<16x8xf32>,
    %63 = vector.extract_strided_slice %40 {offsets = [0, 8], sizes = [16, 8], strides = [1, 1]} : vector<16x32xf32> to vector<16x8xf32>
    %64 = arith.truncf %63 : vector<16x8xf32> to vector<16x8xbf16>
    %65 = vector.extract_strided_slice %41 {offsets = [0, 8], sizes = [16, 8], strides = [1, 1]} : vector<16x32xf32> to vector<16x8xf32>
    %66 = arith.truncf %65 : vector<16x8xf32> to vector<16x8xbf16>
    %cst_26 = arith.constant dense<0.000000e+00> : vector<16x16xf32>
    %67 = tpu.matmul %64, %66, %cst_26 {dimension_numbers = #tpu.dot_dimension_numbers<[1], [1], [0], [0], [0, 0, 1, 0], [], []>} : vector<16x8xbf16>, vector<16x8xbf16>, vector<16x16xf32> -> vector<16x16xf32>
    %cst_27 = arith.constant dense<0xFF800000> : vector<16xf32>
    %68 = vector.multi_reduction <maximumf>, %67, %cst_27 [1] : vector<16x16xf32> to vector<16xf32>
    %69 = vector.shape_cast %68 : vector<16xf32> to vector<16x1xf32>
    %70 = vector.broadcast %69 : vector<16x1xf32> to vector<16x16xf32>
    %71 = arith.subf %67, %70 : vector<16x16xf32>
    %72 = math.exp %71 : vector<16x16xf32>
    %cst_28 = arith.constant dense<0.000000e+00> : vector<16xf32>
    %73 = vector.multi_reduction <add>, %72, %cst_28 [1] : vector<16x16xf32> to vector<16xf32>
    %74 = vector.shape_cast %73 : vector<16xf32> to vector<16x1xf32>
    %75 = tpu.reciprocal %74 {approx = true} : vector<16x1xf32> -> vector<16x1xf32>
    %76 = vector.broadcast %75 : vector<16x1xf32> to vector<16x16xf32>
    %77 = arith.mulf %72, %76 : vector<16x16xf32>
    %78 = arith.truncf %77 : vector<16x16xf32> to vector<16x16xbf16>
    %79 = vector.extract_strided_slice %42 {offsets = [0, 8], sizes = [16, 8], strides = [1, 1]} : vector<16x32xf32> to vector<16x8xf32>
    %80 = arith.truncf %79 : vector<16x8xf32> to vector<16x8xbf16>
    %cst_29 = arith.constant dense<0.000000e+00> : vector<16x8xf32>
    %81 = tpu.matmul %78, %80, %cst_29 {dimension_numbers = #tpu.dot_dimension_numbers<[1], [0], [0], [1], [0, 0, 1, 1], [], []>} : vector<16x16xbf16>, vector<16x8xbf16>, vector<16x8xf32> -> vector<16x8xf32>
    %c0_30 = arith.constant 0 : index
    %c8 = arith.constant 8 : index
    %82 = vector.load %arg21[%c0_30, %c8] : memref<16x32xf32, #tpu.memory_space<vmem>>, vector<16x8xf32>
    tpu.vector_store %arg21[%c0_30, %c8], %81 {strides = array<i32>} : memref<16x32xf32, #tpu.memory_space<vmem>>, vector<16x8xf32>,
    %83 = vector.extract_strided_slice %40 {offsets = [0, 16], sizes = [16, 8], strides = [1, 1]} : vector<16x32xf32> to vector<16x8xf32>
    %84 = arith.truncf %83 : vector<16x8xf32> to vector<16x8xbf16>
    %85 = vector.extract_strided_slice %41 {offsets = [0, 16], sizes = [16, 8], strides = [1, 1]} : vector<16x32xf32> to vector<16x8xf32>
    %86 = arith.truncf %85 : vector<16x8xf32> to vector<16x8xbf16>
    %cst_31 = arith.constant dense<0.000000e+00> : vector<16x16xf32>
    %87 = tpu.matmul %84, %86, %cst_31 {dimension_numbers = #tpu.dot_dimension_numbers<[1], [1], [0], [0], [0, 0, 1, 0], [], []>} : vector<16x8xbf16>, vector<16x8xbf16>, vector<16x16xf32> -> vector<16x16xf32>
    %cst_32 = arith.constant dense<0xFF800000> : vector<16xf32>
    %88 = vector.multi_reduction <maximumf>, %87, %cst_32 [1] : vector<16x16xf32> to vector<16xf32>
    %89 = vector.shape_cast %88 : vector<16xf32> to vector<16x1xf32>
    %90 = vector.broadcast %89 : vector<16x1xf32> to vector<16x16xf32>
    %91 = arith.subf %87, %90 : vector<16x16xf32>
    %92 = math.exp %91 : vector<16x16xf32>
    %cst_33 = arith.constant dense<0.000000e+00> : vector<16xf32>
    %93 = vector.multi_reduction <add>, %92, %cst_33 [1] : vector<16x16xf32> to vector<16xf32>
    %94 = vector.shape_cast %93 : vector<16xf32> to vector<16x1xf32>
    %95 = tpu.reciprocal %94 {approx = true} : vector<16x1xf32> -> vector<16x1xf32>
    %96 = vector.broadcast %95 : vector<16x1xf32> to vector<16x16xf32>
    %97 = arith.mulf %92, %96 : vector<16x16xf32>
    %98 = arith.truncf %97 : vector<16x16xf32> to vector<16x16xbf16>
    %99 = vector.extract_strided_slice %42 {offsets = [0, 16], sizes = [16, 8], strides = [1, 1]} : vector<16x32xf32> to vector<16x8xf32>
    %100 = arith.truncf %99 : vector<16x8xf32> to vector<16x8xbf16>
    %cst_34 = arith.constant dense<0.000000e+00> : vector<16x8xf32>
    %101 = tpu.matmul %98, %100, %cst_34 {dimension_numbers = #tpu.dot_dimension_numbers<[1], [0], [0], [1], [0, 0, 1, 1], [], []>} : vector<16x16xbf16>, vector<16x8xbf16>, vector<16x8xf32> -> vector<16x8xf32>
    %c0_35 = arith.constant 0 : index
    %c16 = arith.constant 16 : index
    %102 = vector.load %arg21[%c0_35, %c16] : memref<16x32xf32, #tpu.memory_space<vmem>>, vector<16x8xf32>
    tpu.vector_store %arg21[%c0_35, %c16], %101 {strides = array<i32>} : memref<16x32xf32, #tpu.memory_space<vmem>>, vector<16x8xf32>,
    %103 = vector.extract_strided_slice %40 {offsets = [0, 24], sizes = [16, 8], strides = [1, 1]} : vector<16x32xf32> to vector<16x8xf32>
    %104 = arith.truncf %103 : vector<16x8xf32> to vector<16x8xbf16>
    %105 = vector.extract_strided_slice %41 {offsets = [0, 24], sizes = [16, 8], strides = [1, 1]} : vector<16x32xf32> to vector<16x8xf32>
    %106 = arith.truncf %105 : vector<16x8xf32> to vector<16x8xbf16>
    %cst_36 = arith.constant dense<0.000000e+00> : vector<16x16xf32>
    %107 = tpu.matmul %104, %106, %cst_36 {dimension_numbers = #tpu.dot_dimension_numbers<[1], [1], [0], [0], [0, 0, 1, 0], [], []>} : vector<16x8xbf16>, vector<16x8xbf16>, vector<16x16xf32> -> vector<16x16xf32>
    %cst_37 = arith.constant dense<0xFF800000> : vector<16xf32>
    %108 = vector.multi_reduction <maximumf>, %107, %cst_37 [1] : vector<16x16xf32> to vector<16xf32>
    %109 = vector.shape_cast %108 : vector<16xf32> to vector<16x1xf32>
    %110 = vector.broadcast %109 : vector<16x1xf32> to vector<16x16xf32>
    %111 = arith.subf %107, %110 : vector<16x16xf32>
    %112 = math.exp %111 : vector<16x16xf32>
    %cst_38 = arith.constant dense<0.000000e+00> : vector<16xf32>
    %113 = vector.multi_reduction <add>, %112, %cst_38 [1] : vector<16x16xf32> to vector<16xf32>
    %114 = vector.shape_cast %113 : vector<16xf32> to vector<16x1xf32>
    %115 = tpu.reciprocal %114 {approx = true} : vector<16x1xf32> -> vector<16x1xf32>
    %116 = vector.broadcast %115 : vector<16x1xf32> to vector<16x16xf32>
    %117 = arith.mulf %112, %116 : vector<16x16xf32>
    %118 = arith.truncf %117 : vector<16x16xf32> to vector<16x16xbf16>
    %119 = vector.extract_strided_slice %42 {offsets = [0, 24], sizes = [16, 8], strides = [1, 1]} : vector<16x32xf32> to vector<16x8xf32>
    %120 = arith.truncf %119 : vector<16x8xf32> to vector<16x8xbf16>
    %cst_39 = arith.constant dense<0.000000e+00> : vector<16x8xf32>
    %121 = tpu.matmul %118, %120, %cst_39 {dimension_numbers = #tpu.dot_dimension_numbers<[1], [0], [0], [1], [0, 0, 1, 1], [], []>} : vector<16x16xbf16>, vector<16x8xbf16>, vector<16x8xf32> -> vector<16x8xf32>
    %c0_40 = arith.constant 0 : index
    %c24 = arith.constant 24 : index
    %122 = vector.load %arg21[%c0_40, %c24] : memref<16x32xf32, #tpu.memory_space<vmem>>, vector<16x8xf32>
    tpu.vector_store %arg21[%c0_40, %c24], %121 {strides = array<i32>} : memref<16x32xf32, #tpu.memory_space<vmem>>, vector<16x8xf32>,
    %c0_41 = arith.constant 0 : index
    %c0_42 = arith.constant 0 : index
    %123 = vector.load %arg21[%c0_41, %c0_42] : memref<16x32xf32, #tpu.memory_space<vmem>>, vector<16x32xf32>
    %c0_43 = arith.constant 0 : index
    %c0_44 = arith.constant 0 : index
    %c0_45 = arith.constant 0 : index
    %124 = vector.load %arg9[%c0_43, %c0_44, %c0_45] : memref<1x32x32xbf16, #tpu.memory_space<vmem>>, vector<1x32x32xbf16>
    %125 = vector.shape_cast %124 : vector<1x32x32xbf16> to vector<32x32xbf16>
    %126 = arith.truncf %123 : vector<16x32xf32> to vector<16x32xbf16>
    %cst_46 = arith.constant dense<0.000000e+00> : vector<16x32xf32>
    %127 = tpu.matmul %126, %125, %cst_46 {dimension_numbers = #tpu.dot_dimension_numbers<[1], [0], [0], [1], [0, 0, 1, 1], [], []>} : vector<16x32xbf16>, vector<32x32xbf16>, vector<16x32xf32> -> vector<16x32xf32>
    %c0_47 = arith.constant 0 : index
    %c0_48 = arith.constant 0 : index
    %c0_49 = arith.constant 0 : index
    %128 = vector.load %arg10[%c0_47, %c0_48, %c0_49] : memref<1x1x32xf32, #tpu.memory_space<vmem>>, vector<1x1x32xf32>
    %129 = vector.shape_cast %128 : vector<1x1x32xf32> to vector<1x32xf32>
    %130 = vector.broadcast %129 : vector<1x32xf32> to vector<16x32xf32>
    %131 = arith.addf %127, %130 : vector<16x32xf32>
    %132 = arith.addf %3, %131 : vector<16x32xf32>
    %c0_50 = arith.constant 0 : index
    %c0_51 = arith.constant 0 : index
    %c0_52 = arith.constant 0 : index
    %133 = vector.load %arg11[%c0_50, %c0_51, %c0_52] : memref<1x1x32xf32, #tpu.memory_space<vmem>>, vector<1x1x32xf32>
    %134 = vector.shape_cast %133 : vector<1x1x32xf32> to vector<1x32xf32>
    %c0_53 = arith.constant 0 : index
    %c0_54 = arith.constant 0 : index
    %c0_55 = arith.constant 0 : index
    %135 = vector.load %arg12[%c0_53, %c0_54, %c0_55] : memref<1x1x32xf32, #tpu.memory_space<vmem>>, vector<1x1x32xf32>
    %136 = vector.shape_cast %135 : vector<1x1x32xf32> to vector<1x32xf32>
    %cst_56 = arith.constant dense<0.000000e+00> : vector<16xf32>
    %137 = vector.multi_reduction <add>, %132, %cst_56 [1] : vector<16x32xf32> to vector<16xf32>
    %138 = vector.shape_cast %137 : vector<16xf32> to vector<16x1xf32>
    %cst_57 = arith.constant 3.200000e+01 : f32
    %139 = vector.broadcast %cst_57 : f32 to vector<16x1xf32>
    %140 = arith.divf %138, %139 : vector<16x1xf32>
    %141 = vector.broadcast %140 : vector<16x1xf32> to vector<16x32xf32>
    %142 = arith.subf %132, %141 : vector<16x32xf32>
    %143 = arith.mulf %142, %142 : vector<16x32xf32>
    %cst_58 = arith.constant dense<0.000000e+00> : vector<16xf32>
    %144 = vector.multi_reduction <add>, %143, %cst_58 [1] : vector<16x32xf32> to vector<16xf32>
    %145 = vector.shape_cast %144 : vector<16xf32> to vector<16x1xf32>
    %cst_59 = arith.constant 3.200000e+01 : f32
    %146 = vector.broadcast %cst_59 : f32 to vector<16x1xf32>
    %147 = arith.divf %145, %146 : vector<16x1xf32>
    %148 = vector.broadcast %140 : vector<16x1xf32> to vector<16x32xf32>
    %149 = arith.subf %132, %148 : vector<16x32xf32>
    %cst_60 = arith.constant 9.99999974E-6 : f32
    %150 = vector.broadcast %cst_60 : f32 to vector<16x1xf32>
    %151 = arith.addf %147, %150 : vector<16x1xf32>
    %152 = math.rsqrt %151 : vector<16x1xf32>
    %153 = vector.broadcast %152 : vector<16x1xf32> to vector<16x32xf32>
    %154 = arith.mulf %149, %153 : vector<16x32xf32>
    %155 = vector.broadcast %134 : vector<1x32xf32> to vector<16x32xf32>
    %156 = arith.mulf %154, %155 : vector<16x32xf32>
    %157 = vector.broadcast %136 : vector<1x32xf32> to vector<16x32xf32>
    %158 = arith.addf %156, %157 : vector<16x32xf32>
    %c0_61 = arith.constant 0 : index
    %c0_62 = arith.constant 0 : index
    %c0_63 = arith.constant 0 : index
    %159 = vector.load %arg13[%c0_61, %c0_62, %c0_63] : memref<1x32x128xbf16, #tpu.memory_space<vmem>>, vector<1x32x128xbf16>
    %160 = vector.shape_cast %159 : vector<1x32x128xbf16> to vector<32x128xbf16>
    %161 = arith.truncf %158 : vector<16x32xf32> to vector<16x32xbf16>
    %cst_64 = arith.constant dense<0.000000e+00> : vector<16x128xf32>
    %162 = tpu.matmul %161, %160, %cst_64 {dimension_numbers = #tpu.dot_dimension_numbers<[1], [0], [0], [1], [0, 0, 1, 1], [], []>} : vector<16x32xbf16>, vector<32x128xbf16>, vector<16x128xf32> -> vector<16x128xf32>
    %c0_65 = arith.constant 0 : index
    %c0_66 = arith.constant 0 : index
    %c0_67 = arith.constant 0 : index
    %163 = vector.load %arg14[%c0_65, %c0_66, %c0_67] : memref<1x1x128xf32, #tpu.memory_space<vmem>>, vector<1x1x128xf32>
    %164 = vector.shape_cast %163 : vector<1x1x128xf32> to vector<1x128xf32>
    %165 = vector.broadcast %164 : vector<1x128xf32> to vector<16x128xf32>
    %166 = arith.addf %162, %165 : vector<16x128xf32>
    %cst_68 = arith.constant 5.000000e-01 : f32
    %167 = vector.broadcast %cst_68 : f32 to vector<16x128xf32>
    %168 = arith.mulf %167, %166 : vector<16x128xf32>
    %cst_69 = arith.constant 4.471500e-02 : f32
    %169 = vector.broadcast %cst_69 : f32 to vector<16x128xf32>
    %170 = arith.mulf %169, %166 : vector<16x128xf32>
    %171 = arith.mulf %170, %166 : vector<16x128xf32>
    %172 = arith.mulf %171, %166 : vector<16x128xf32>
    %173 = arith.addf %166, %172 : vector<16x128xf32>
    %cst_70 = arith.constant 0.797884583 : f32
    %174 = vector.broadcast %cst_70 : f32 to vector<16x128xf32>
    %175 = arith.mulf %174, %173 : vector<16x128xf32>
    %176 = math.tanh %175 : vector<16x128xf32>
    %cst_71 = arith.constant 1.000000e+00 : f32
    %177 = vector.broadcast %cst_71 : f32 to vector<16x128xf32>
    %178 = arith.addf %177, %176 : vector<16x128xf32>
    %179 = arith.mulf %168, %178 : vector<16x128xf32>
    %c0_72 = arith.constant 0 : index
    %c0_73 = arith.constant 0 : index
    %c0_74 = arith.constant 0 : index
    %180 = vector.load %arg15[%c0_72, %c0_73, %c0_74] : memref<1x128x32xbf16, #tpu.memory_space<vmem>>, vector<1x128x32xbf16>
    %181 = vector.shape_cast %180 : vector<1x128x32xbf16> to vector<128x32xbf16>
    %182 = arith.truncf %179 : vector<16x128xf32> to vector<16x128xbf16>
    %cst_75 = arith.constant dense<0.000000e+00> : vector<16x32xf32>
    %183 = tpu.matmul %182, %181, %cst_75 {dimension_numbers = #tpu.dot_dimension_numbers<[1], [0], [0], [1], [0, 0, 1, 1], [], []>} : vector<16x128xbf16>, vector<128x32xbf16>, vector<16x32xf32> -> vector<16x32xf32>
    %c0_76 = arith.constant 0 : index
    %c0_77 = arith.constant 0 : index
    %c0_78 = arith.constant 0 : index
    %184 = vector.load %arg16[%c0_76, %c0_77, %c0_78] : memref<1x1x32xf32, #tpu.memory_space<vmem>>, vector<1x1x32xf32>
    %185 = vector.shape_cast %184 : vector<1x1x32xf32> to vector<1x32xf32>
    %186 = vector.broadcast %185 : vector<1x32xf32> to vector<16x32xf32>
    %187 = arith.addf %183, %186 : vector<16x32xf32>
    %188 = arith.addf %132, %187 : vector<16x32xf32>
    %c0_79 = arith.constant 0 : index
    %c0_80 = arith.constant 0 : index
    %189 = vector.load %arg20[%c0_79, %c0_80] : memref<16x32xf32, #tpu.memory_space<vmem>>, vector<16x32xf32>
    tpu.vector_store %arg20[%c0_79, %c0_80], %188 {strides = array<i32>} : memref<16x32xf32, #tpu.memory_space<vmem>>, vector<16x32xf32>,
    %c1_i32 = arith.constant 1 : i32
    %190 = arith.cmpi eq, %arg1, %c1_i32 : i32
    %191 = arith.extui %190 : i1 to i32
    %c0_i32_81 = arith.constant 0 : i32
    %192 = arith.cmpi ne, %191, %c0_i32_81 : i32
    scf.if %192 {
      %c0_82 = arith.constant 0 : index
      %c0_83 = arith.constant 0 : index
      %193 = vector.load %arg17[%c0_82, %c0_83] : memref<32x48xbf16, #tpu.memory_space<vmem>>, vector<32x48xbf16>
      %194 = arith.truncf %188 : vector<16x32xf32> to vector<16x32xbf16>
      %cst_84 = arith.constant dense<0.000000e+00> : vector<16x48xf32>
      %195 = tpu.matmul %194, %193, %cst_84 {dimension_numbers = #tpu.dot_dimension_numbers<[1], [0], [0], [1], [0, 0, 1, 1], [], []>} : vector<16x32xbf16>, vector<32x48xbf16>, vector<16x48xf32> -> vector<16x48xf32>
      %c0_85 = arith.constant 0 : index
      %c0_86 = arith.constant 0 : index
      %196 = vector.load %arg18[%c0_85, %c0_86] : memref<1x48xf32, #tpu.memory_space<vmem>>, vector<1x48xf32>
      %197 = vector.broadcast %196 : vector<1x48xf32> to vector<16x48xf32>
      %198 = arith.addf %195, %197 : vector<16x48xf32>
      %c0_87 = arith.constant 0 : index
      %c0_88 = arith.constant 0 : index
      %c0_89 = arith.constant 0 : index
      %199 = vector.load %arg19[%c0_87, %c0_88, %c0_89] : memref<1x16x48xf32, #tpu.memory_space<vmem>>, vector<1x16x48xf32>
      %200 = vector.shape_cast %199 : vector<1x16x48xf32> to vector<16x48xf32>
      %201 = vector.shape_cast %198 : vector<16x48xf32> to vector<1x16x48xf32>
      tpu.vector_store %arg19[%c0_87, %c0_88, %c0_89], %201 {strides = array<i32>} : memref<1x16x48xf32, #tpu.memory_space<vmem>>, vector<1x16x48xf32>,
    } else {
    }
    return
  }
  func.func @transform_0(%arg0: i32, %arg1: i32) -> (i32, i32, i32) {
    %c0_i32 = arith.constant 0 : i32
    %c0_i32_0 = arith.constant 0 : i32
    %c0_i32_1 = arith.constant 0 : i32
    return %arg0, %c0_i32, %c0_i32_0 : i32, i32, i32
  }
  func.func @transform_1(%arg0: i32, %arg1: i32) -> (i32, i32) {
    %c0_i32 = arith.constant 0 : i32
    %c0_i32_0 = arith.constant 0 : i32
    %c0_i32_1 = arith.constant 0 : i32
    return %c0_i32, %c0_i32_0 : i32, i32
  }
  func.func @transform_2(%arg0: i32, %arg1: i32) -> (i32, i32) {
    %c0_i32 = arith.constant 0 : i32
    %c0_i32_0 = arith.constant 0 : i32
    %c0_i32_1 = arith.constant 0 : i32
    return %c0_i32, %c0_i32_0 : i32, i32
  }
  func.func @transform_3(%arg0: i32, %arg1: i32) -> (i32, i32, i32) {
    %c0_i32 = arith.constant 0 : i32
    %c0_i32_0 = arith.constant 0 : i32
    %c0_i32_1 = arith.constant 0 : i32
    return %arg1, %c0_i32, %c0_i32_0 : i32, i32, i32
  }
  func.func @transform_4(%arg0: i32, %arg1: i32) -> (i32, i32, i32) {
    %c0_i32 = arith.constant 0 : i32
    %c0_i32_0 = arith.constant 0 : i32
    %c0_i32_1 = arith.constant 0 : i32
    return %arg1, %c0_i32, %c0_i32_0 : i32, i32, i32
  }
  func.func @transform_5(%arg0: i32, %arg1: i32) -> (i32, i32, i32) {
    %c0_i32 = arith.constant 0 : i32
    %c0_i32_0 = arith.constant 0 : i32
    %c0_i32_1 = arith.constant 0 : i32
    return %arg1, %c0_i32, %c0_i32_0 : i32, i32, i32
  }
  func.func @transform_6(%arg0: i32, %arg1: i32) -> (i32, i32, i32) {
    %c0_i32 = arith.constant 0 : i32
    %c0_i32_0 = arith.constant 0 : i32
    %c0_i32_1 = arith.constant 0 : i32
    return %arg1, %c0_i32, %c0_i32_0 : i32, i32, i32
  }
  func.func @transform_7(%arg0: i32, %arg1: i32) -> (i32, i32, i32) {
    %c0_i32 = arith.constant 0 : i32
    %c0_i32_0 = arith.constant 0 : i32
    %c0_i32_1 = arith.constant 0 : i32
    return %arg1, %c0_i32, %c0_i32_0 : i32, i32, i32
  }
  func.func @transform_8(%arg0: i32, %arg1: i32) -> (i32, i32, i32) {
    %c0_i32 = arith.constant 0 : i32
    %c0_i32_0 = arith.constant 0 : i32
    %c0_i32_1 = arith.constant 0 : i32
    return %arg1, %c0_i32, %c0_i32_0 : i32, i32, i32
  }
  func.func @transform_9(%arg0: i32, %arg1: i32) -> (i32, i32, i32) {
    %c0_i32 = arith.constant 0 : i32
    %c0_i32_0 = arith.constant 0 : i32
    %c0_i32_1 = arith.constant 0 : i32
    return %arg1, %c0_i32, %c0_i32_0 : i32, i32, i32
  }
  func.func @transform_10(%arg0: i32, %arg1: i32) -> (i32, i32, i32) {
    %c0_i32 = arith.constant 0 : i32
    %c0_i32_0 = arith.constant 0 : i32
    %c0_i32_1 = arith.constant 0 : i32
    return %arg1, %c0_i32, %c0_i32_0 : i32, i32, i32
  }
  func.func @transform_11(%arg0: i32, %arg1: i32) -> (i32, i32, i32) {
    %c0_i32 = arith.constant 0 : i32
    %c0_i32_0 = arith.constant 0 : i32
    %c0_i32_1 = arith.constant 0 : i32
    return %arg1, %c0_i32, %c0_i32_0 : i32, i32, i32
  }
  func.func @transform_12(%arg0: i32, %arg1: i32) -> (i32, i32, i32) {
    %c0_i32 = arith.constant 0 : i32
    %c0_i32_0 = arith.constant 0 : i32
    %c0_i32_1 = arith.constant 0 : i32
    return %arg1, %c0_i32, %c0_i32_0 : i32, i32, i32
  }
  func.func @transform_13(%arg0: i32, %arg1: i32) -> (i32, i32, i32) {
    %c0_i32 = arith.constant 0 : i32
    %c0_i32_0 = arith.constant 0 : i32
    %c0_i32_1 = arith.constant 0 : i32
    return %arg1, %c0_i32, %c0_i32_0 : i32, i32, i32
  }
  func.func @transform_14(%arg0: i32, %arg1: i32) -> (i32, i32, i32) {
    %c0_i32 = arith.constant 0 : i32
    %c0_i32_0 = arith.constant 0 : i32
    %c0_i32_1 = arith.constant 0 : i32
    return %arg1, %c0_i32, %c0_i32_0 : i32, i32, i32
  }
  func.func @transform_15(%arg0: i32, %arg1: i32) -> (i32, i32) {
    %c0_i32 = arith.constant 0 : i32
    %c0_i32_0 = arith.constant 0 : i32
    %c0_i32_1 = arith.constant 0 : i32
    return %c0_i32, %c0_i32_0 : i32, i32
  }
  func.func @transform_16(%arg0: i32, %arg1: i32) -> (i32, i32) {
    %c0_i32 = arith.constant 0 : i32
    %c0_i32_0 = arith.constant 0 : i32
    %c0_i32_1 = arith.constant 0 : i32
    return %c0_i32, %c0_i32_0 : i32, i32
  }
  func.func @transform_17(%arg0: i32, %arg1: i32) -> (i32, i32, i32) {
    %c0_i32 = arith.constant 0 : i32
    %c0_i32_0 = arith.constant 0 : i32
    %c0_i32_1 = arith.constant 0 : i32
    return %arg0, %c0_i32, %c0_i32_0 : i32, i32, i32
  }
}

</mosaic_0001>

<llo_original>
// kernel: mul.7
$region0: #{mul.7}
  %s0 = inlined_call_operand.vmem [shape: f32[4,16], index: 0, kind: input, shape index: {}]
  %s1 = inlined_call_operand.vmem [shape: f32[64], index: 1, kind: output, shape index: {}]
  $region1: #{mul.7} parent=0
    #allocation0 [shape = 'u8[4096]{0}', space=vmem, size = 0x1000, scoped, tag = 'scoped mem for output reshape']
    #allocation1 [shape = 'u8[4096]{0}', space=vmem, size = 0x1000, scoped, tag = 'scoped mem for input reshape']
    %s3 = sshllo.u32 0, 4
    %v4 = vld [vmem:[%s0] sm:%s3]
    %5 = vst [vmem:[#allocation1] sm:%s3] %v4
    %v6 = vld [vmem:[#allocation1] sm:$0x1]
    %vm7 = vcmask 130048
    %8 = vst.msk [vmem:[#allocation0] sm:$0x1] %vm7, %v6
    %s9 = scalar_lea.vmem [#allocation1], 3
    %v10 = vld [vmem:[%s9] sm:$0x1]
    %11 = vrot.lane.b32.xlu0 %v10, 48
    %v12 = vpop.permute.xlu0 %11
    %vm13 = vcmask 523648
    %14 = vst.msk [vmem:[#allocation0] sm:$0x1] %vm13, %v12
    %s15 = scalar_lea.vmem [#allocation1], 2
    %v16 = vld [vmem:[%s15] sm:$0x1]
    %17 = vrot.lane.b32.xlu0 %v16, 32
    %v18 = vpop.permute.xlu0 %17
    %vm19 = vcmask 392448
    %20 = vst.msk [vmem:[#allocation0] sm:$0x1] %vm19, %v18
    %s21 = scalar_lea.vmem [#allocation1], 1
    %v22 = vld [vmem:[%s21] sm:$0x1]
    %23 = vrot.lane.b32.xlu0 %v22, 16
    %v24 = vpop.permute.xlu0 %23
    %vm25 = vcmask 261248
    %26 = vst.msk [vmem:[#allocation0] sm:$0x1] %vm25, %v24
    %s28 = sshllo.u32 0, 1
    %v30 = vld [vmem:[#allocation0] sm:%s28]
    %s31 = sshllo.u32 0, 1
    %32 = vst [vmem:[%s1] sm:%s31] %v30

// kernel: vit_seg_forward.1
$region0: #{vit_seg_forward.1}
  #allocation0 [shape = 'u32[]', space=smem, size = 0x4, offset = 0x4, fixed_abs, tag = 'smem constant byte address 0x4 - core index']
  #allocation1 [shape = 'u32[144,128]{1,0:T(1,128)}', space=vmem, size = 0x12000, scoped, tag = 'internal scratch']
  #allocation2 [shape = 'f32[16,32]{1,0:T(8,128)}', space=vmem, size = 0x2000, scoped, tag = 'scratch operand']
  #allocation3 [shape = 'f32[16,32]{1,0:T(8,128)}', space=vmem, size = 0x2000, scoped, tag = 'scratch operand']
  %s0 = inlined_call_operand.vmem [shape: f32[2,16,64], index: 0, kind: input, shape index: {}]
  %s1 = inlined_call_operand.vmem [shape: bf16[64,32], index: 1, kind: input, shape index: {}]
  %s2 = inlined_call_operand.vmem [shape: f32[16,32], index: 2, kind: input, shape index: {}]
  %s3 = inlined_call_operand.vmem [shape: f32[2,1,32], index: 3, kind: input, shape index: {}]
  %s4 = inlined_call_operand.vmem [shape: f32[2,1,32], index: 4, kind: input, shape index: {}]
  %s5 = inlined_call_operand.vmem [shape: bf16[2,32,96], index: 5, kind: input, shape index: {}]
  %s6 = inlined_call_operand.vmem [shape: f32[2,1,96], index: 6, kind: input, shape index: {}]
  %s7 = inlined_call_operand.vmem [shape: bf16[2,32,32], index: 7, kind: input, shape index: {}]
  %s8 = inlined_call_operand.vmem [shape: f32[2,1,32], index: 8, kind: input, shape index: {}]
  %s9 = inlined_call_operand.vmem [shape: f32[2,1,32], index: 9, kind: input, shape index: {}]
  %s10 = inlined_call_operand.vmem [shape: f32[2,1,32], index: 10, kind: input, shape index: {}]
  %s11 = inlined_call_operand.vmem [shape: bf16[2,32,128], index: 11, kind: input, shape index: {}]
  %s12 = inlined_call_operand.vmem [shape: f32[2,1,128], index: 12, kind: input, shape index: {}]
  %s13 = inlined_call_operand.vmem [shape: bf16[2,128,32], index: 13, kind: input, shape index: {}]
  %s14 = inlined_call_operand.vmem [shape: f32[2,1,32], index: 14, kind: input, shape index: {}]
  %s15 = inlined_call_operand.vmem [shape: bf16[32,48], index: 15, kind: input, shape index: {}]
  %s16 = inlined_call_operand.vmem [shape: f32[1,48], index: 16, kind: input, shape index: {}]
  %s17 = inlined_call_operand.vmem [shape: f32[2,16,48], index: 17, kind: output, shape index: {}]
  %s18 = sld [smem:[#allocation0]]
  $region109: #{vit_seg_forward.1} parent=0
    _
  %s20 = ssub.s32 1, %s18
  %s21 = scalar_select 0, %s20, %s18
  loop: start=0, step=1, limit=6
  $region2: #{vit_seg_forward.1} parent=0 // loop_pre_header
    _
  $region3: #{vit_seg_forward.1} parent=0 // loop_header
    %s23 = sphi 0, %s27
    %p24 = scmp.ge.s32.totalorder %s23, 6
    %s30 = sphi 0, %s42
    %s31 = sphi 0, %s38
    %s32 = sphi 0, %s30
    %s33 = sphi 0, %s31
    %s34 = sphi 0, %s32
    %s35 = sphi 0, %s33
    %s45 = sphi 0, %s47
    %s48 = sphi 0, %s45
    %s49 = sphi 0, %s48
    %s65 = sphi 0, %s49
    %s69 = sphi 0, %s69
    %s71 = sphi 0, %s69
    %s72 = sphi 0, %s71
    %s86 = sphi 0, %s72
    %s90 = sphi 0, %s90
    %s92 = sphi 0, %s90
    %s93 = sphi 0, %s92
    %s107 = sphi 0, %s93
    %s113 = sphi 0, %s115
    %s116 = sphi 0, %s113
    %s117 = sphi 0, %s116
    %s133 = sphi 0, %s117
    %s139 = sphi 0, %s141
    %s142 = sphi 0, %s139
    %s143 = sphi 0, %s142
    %s159 = sphi 0, %s143
    %s165 = sphi 0, %s167
    %s168 = sphi 0, %s165
    %s169 = sphi 0, %s168
    %s185 = sphi 0, %s169
    %s191 = sphi 0, %s193
    %s194 = sphi 0, %s191
    %s195 = sphi 0, %s194
    %s211 = sphi 0, %s195
    %s217 = sphi 0, %s219
    %s220 = sphi 0, %s217
    %s221 = sphi 0, %s220
    %s237 = sphi 0, %s221
    %s243 = sphi 0, %s245
    %s246 = sphi 0, %s243
    %s247 = sphi 0, %s246
    %s263 = sphi 0, %s247
    %s269 = sphi 0, %s271
    %s272 = sphi 0, %s269
    %s273 = sphi 0, %s272
    %s289 = sphi 0, %s273
    %s295 = sphi 0, %s297
    %s298 = sphi 0, %s295
    %s299 = sphi 0, %s298
    %s315 = sphi 0, %s299
    %s321 = sphi 0, %s323
    %s324 = sphi 0, %s321
    %s325 = sphi 0, %s324
    %s341 = sphi 0, %s325
    %s347 = sphi 0, %s349
    %s350 = sphi 0, %s347
    %s351 = sphi 0, %s350
    %s367 = sphi 0, %s351
    %s373 = sphi 0, %s375
    %s376 = sphi 0, %s373
    %s377 = sphi 0, %s376
    %s393 = sphi 0, %s377
    %s399 = sphi 0, %s401
    %s402 = sphi 0, %s399
    %s403 = sphi 0, %s402
    %s419 = sphi 0, %s403
    %s423 = sphi 0, %s423
    %s425 = sphi 0, %s423
    %s426 = sphi 0, %s425
    %s440 = sphi 0, %s426
    %s444 = sphi 0, %s444
    %s446 = sphi 0, %s444
    %s447 = sphi 0, %s446
    %s461 = sphi 0, %s447
    %s467 = sphi 0, %s469
    %s470 = sphi 0, %s467
    %s471 = sphi 0, %s470
    %s487 = sphi 0, %s471
  $region4: #{vit_seg_forward.1} parent=0 // loop_header_branch
    %26 = sbr.rel (%p24) target = $region8
  $region5: #{vit_seg_forward.1} parent=0 // loop_body
    %s28 = ssub.s32 %s23, 1
    %s29 = ssub.s32 %s23, 2
    %s36 = sadd.s32 1, %s31
    %p37 = scmp.ge.s32.totalorder %s36, 2
    %s38 = scalar_select %p37, 0, %s36
    %s39 = sadd.s32 1, %s30
    %s40 = scalar_select %p37, %s39, %s30
    %p41 = scmp.ge.s32.totalorder %s40, 2
    %s42 = scalar_select %p41, 0, %s40
    %s43 = ssub.s32 %s30, %s42
    %p44 = scmp.eq.s32.totalorder %s43, 0
    %s46 = sadd.s32 %s45, 1
    %s47 = scalar_select %p44, %s45, %s46
    %p50 = pneg %p44
    %p51 = scmp.eq.s32.totalorder %s23, 3
    %p52 = por %p50, %p51
    %p53 = scmp.ne.s32.totalorder %s45, %s48
    %p54 = scmp.eq.s32.totalorder %s23, 0
    %p55 = por %p53, %p54
    %p56 = scmp.ne.s32.totalorder %s45, %s48
    %p57 = scmp.eq.s32.totalorder %s28, 3
    %p58 = por %p56, %p57
    %p59 = scmp.ne.s32.totalorder %s48, %s49
    %p60 = scmp.eq.s32.totalorder %s28, 0
    %p61 = por %p59, %p60
    %p62 = scmp.ne.s32.totalorder %s48, %s49
    %p63 = scmp.eq.s32.totalorder %s29, 3
    %p64 = por %p62, %p63
    %p66 = scmp.ne.s32.totalorder %s49, %s65
    %p67 = scmp.eq.s32.totalorder %s29, 0
    %p68 = por %p66, %p67
    %s70 = sadd.s32 %s69, 1
    %p73 = scmp.eq.s32.totalorder %s23, 3
    %p74 = scmp.ne.s32.totalorder %s69, %s71
    %p75 = scmp.eq.s32.totalorder %s23, 0
    %p76 = por %p74, %p75
    %p77 = scmp.ne.s32.totalorder %s69, %s71
    %p78 = scmp.eq.s32.totalorder %s28, 3
    %p79 = por %p77, %p78
    %p80 = scmp.ne.s32.totalorder %s71, %s72
    %p81 = scmp.eq.s32.totalorder %s28, 0
    %p82 = por %p80, %p81
    %p83 = scmp.ne.s32.totalorder %s71, %s72
    %p84 = scmp.eq.s32.totalorder %s29, 3
    %p85 = por %p83, %p84
    %p87 = scmp.ne.s32.totalorder %s72, %s86
    %p88 = scmp.eq.s32.totalorder %s29, 0
    %p89 = por %p87, %p88
    %s91 = sadd.s32 %s90, 1
    %p94 = scmp.eq.s32.totalorder %s23, 3
    %p95 = scmp.ne.s32.totalorder %s90, %s92
    %p96 = scmp.eq.s32.totalorder %s23, 0
    %p97 = por %p95, %p96
    %p98 = scmp.ne.s32.totalorder %s90, %s92
    %p99 = scmp.eq.s32.totalorder %s28, 3
    %p100 = por %p98, %p99
    %p101 = scmp.ne.s32.totalorder %s92, %s93
    %p102 = scmp.eq.s32.totalorder %s28, 0
    %p103 = por %p101, %p102
    %p104 = scmp.ne.s32.totalorder %s92, %s93
    %p105 = scmp.eq.s32.totalorder %s29, 3
    %p106 = por %p104, %p105
    %p108 = scmp.ne.s32.totalorder %s93, %s107
    %p109 = scmp.eq.s32.totalorder %s29, 0
    %p110 = por %p108, %p109
    %s111 = ssub.s32 %s31, %s38
    %p112 = scmp.eq.s32.totalorder %s111, 0
    %s114 = sadd.s32 %s113, 1
    %s115 = scalar_select %p112, %s113, %s114
    %p118 = pneg %p112
    %p119 = scmp.eq.s32.totalorder %s23, 3
    %p120 = por %p118, %p119
    %p121 = scmp.ne.s32.totalorder %s113, %s116
    %p122 = scmp.eq.s32.totalorder %s23, 0
    %p123 = por %p121, %p122
    %p124 = scmp.ne.s32.totalorder %s113, %s116
    %p125 = scmp.eq.s32.totalorder %s28, 3
    %p126 = por %p124, %p125
    %p127 = scmp.ne.s32.totalorder %s116, %s117
    %p128 = scmp.eq.s32.totalorder %s28, 0
    %p129 = por %p127, %p128
    %p130 = scmp.ne.s32.totalorder %s116, %s117
    %p131 = scmp.eq.s32.totalorder %s29, 3
    %p132 = por %p130, %p131
    %p134 = scmp.ne.s32.totalorder %s117, %s133
    %p135 = scmp.eq.s32.totalorder %s29, 0
    %p136 = por %p134, %p135
    %s137 = ssub.s32 %s31, %s38
    %p138 = scmp.eq.s32.totalorder %s137, 0
    %s140 = sadd.s32 %s139, 1
    %s141 = scalar_select %p138, %s139, %s140
    %p144 = pneg %p138
    %p145 = scmp.eq.s32.totalorder %s23, 3
    %p146 = por %p144, %p145
    %p147 = scmp.ne.s32.totalorder %s139, %s142
    %p148 = scmp.eq.s32.totalorder %s23, 0
    %p149 = por %p147, %p148
    %p150 = scmp.ne.s32.totalorder %s139, %s142
    %p151 = scmp.eq.s32.totalorder %s28, 3
    %p152 = por %p150, %p151
    %p153 = scmp.ne.s32.totalorder %s142, %s143
    %p154 = scmp.eq.s32.totalorder %s28, 0
    %p155 = por %p153, %p154
    %p156 = scmp.ne.s32.totalorder %s142, %s143
    %p157 = scmp.eq.s32.totalorder %s29, 3
    %p158 = por %p156, %p157
    %p160 = scmp.ne.s32.totalorder %s143, %s159
    %p161 = scmp.eq.s32.totalorder %s29, 0
    %p162 = por %p160, %p161
    %s163 = ssub.s32 %s31, %s38
    %p164 = scmp.eq.s32.totalorder %s163, 0
    %s166 = sadd.s32 %s165, 1
    %s167 = scalar_select %p164, %s165, %s166
    %p170 = pneg %p164
    %p171 = scmp.eq.s32.totalorder %s23, 3
    %p172 = por %p170, %p171
    %p173 = scmp.ne.s32.totalorder %s165, %s168
    %p174 = scmp.eq.s32.totalorder %s23, 0
    %p175 = por %p173, %p174
    %p176 = scmp.ne.s32.totalorder %s165, %s168
    %p177 = scmp.eq.s32.totalorder %s28, 3
    %p178 = por %p176, %p177
    %p179 = scmp.ne.s32.totalorder %s168, %s169
    %p180 = scmp.eq.s32.totalorder %s28, 0
    %p181 = por %p179, %p180
    %p182 = scmp.ne.s32.totalorder %s168, %s169
    %p183 = scmp.eq.s32.totalorder %s29, 3
    %p184 = por %p182, %p183
    %p186 = scmp.ne.s32.totalorder %s169, %s185
    %p187 = scmp.eq.s32.totalorder %s29, 0
    %p188 = por %p186, %p187
    %s189 = ssub.s32 %s31, %s38
    %p190 = scmp.eq.s32.totalorder %s189, 0
    %s192 = sadd.s32 %s191, 1
    %s193 = scalar_select %p190, %s191, %s192
    %p196 = pneg %p190
    %p197 = scmp.eq.s32.totalorder %s23, 3
    %p198 = por %p196, %p197
    %p199 = scmp.ne.s32.totalorder %s191, %s194
    %p200 = scmp.eq.s32.totalorder %s23, 0
    %p201 = por %p199, %p200
    %p202 = scmp.ne.s32.totalorder %s191, %s194
    %p203 = scmp.eq.s32.totalorder %s28, 3
    %p204 = por %p202, %p203
    %p205 = scmp.ne.s32.totalorder %s194, %s195
    %p206 = scmp.eq.s32.totalorder %s28, 0
    %p207 = por %p205, %p206
    %p208 = scmp.ne.s32.totalorder %s194, %s195
    %p209 = scmp.eq.s32.totalorder %s29, 3
    %p210 = por %p208, %p209
    %p212 = scmp.ne.s32.totalorder %s195, %s211
    %p213 = scmp.eq.s32.totalorder %s29, 0
    %p214 = por %p212, %p213
    %s215 = ssub.s32 %s31, %s38
    %p216 = scmp.eq.s32.totalorder %s215, 0
    %s218 = sadd.s32 %s217, 1
    %s219 = scalar_select %p216, %s217, %s218
    %p222 = pneg %p216
    %p223 = scmp.eq.s32.totalorder %s23, 3
    %p224 = por %p222, %p223
    %p225 = scmp.ne.s32.totalorder %s217, %s220
    %p226 = scmp.eq.s32.totalorder %s23, 0
    %p227 = por %p225, %p226
    %p228 = scmp.ne.s32.totalorder %s217, %s220
    %p229 = scmp.eq.s32.totalorder %s28, 3
    %p230 = por %p228, %p229
    %p231 = scmp.ne.s32.totalorder %s220, %s221
    %p232 = scmp.eq.s32.totalorder %s28, 0
    %p233 = por %p231, %p232
    %p234 = scmp.ne.s32.totalorder %s220, %s221
    %p235 = scmp.eq.s32.totalorder %s29, 3
    %p236 = por %p234, %p235
    %p238 = scmp.ne.s32.totalorder %s221, %s237
    %p239 = scmp.eq.s32.totalorder %s29, 0
    %p240 = por %p238, %p239
    %s241 = ssub.s32 %s31, %s38
    %p242 = scmp.eq.s32.totalorder %s241, 0
    %s244 = sadd.s32 %s243, 1
    %s245 = scalar_select %p242, %s243, %s244
    %p248 = pneg %p242
    %p249 = scmp.eq.s32.totalorder %s23, 3
    %p250 = por %p248, %p249
    %p251 = scmp.ne.s32.totalorder %s243, %s246
    %p252 = scmp.eq.s32.totalorder %s23, 0
    %p253 = por %p251, %p252
    %p254 = scmp.ne.s32.totalorder %s243, %s246
    %p255 = scmp.eq.s32.totalorder %s28, 3
    %p256 = por %p254, %p255
    %p257 = scmp.ne.s32.totalorder %s246, %s247
    %p258 = scmp.eq.s32.totalorder %s28, 0
    %p259 = por %p257, %p258
    %p260 = scmp.ne.s32.totalorder %s246, %s247
    %p261 = scmp.eq.s32.totalorder %s29, 3
    %p262 = por %p260, %p261
    %p264 = scmp.ne.s32.totalorder %s247, %s263
    %p265 = scmp.eq.s32.totalorder %s29, 0
    %p266 = por %p264, %p265
    %s267 = ssub.s32 %s31, %s38
    %p268 = scmp.eq.s32.totalorder %s267, 0
    %s270 = sadd.s32 %s269, 1
    %s271 = scalar_select %p268, %s269, %s270
    %p274 = pneg %p268
    %p275 = scmp.eq.s32.totalorder %s23, 3
    %p276 = por %p274, %p275
    %p277 = scmp.ne.s32.totalorder %s269, %s272
    %p278 = scmp.eq.s32.totalorder %s23, 0
    %p279 = por %p277, %p278
    %p280 = scmp.ne.s32.totalorder %s269, %s272
    %p281 = scmp.eq.s32.totalorder %s28, 3
    %p282 = por %p280, %p281
    %p283 = scmp.ne.s32.totalorder %s272, %s273
    %p284 = scmp.eq.s32.totalorder %s28, 0
    %p285 = por %p283, %p284
    %p286 = scmp.ne.s32.totalorder %s272, %s273
    %p287 = scmp.eq.s32.totalorder %s29, 3
    %p288 = por %p286, %p287
    %p290 = scmp.ne.s32.totalorder %s273, %s289
    %p291 = scmp.eq.s32.totalorder %s29, 0
    %p292 = por %p290, %p291
    %s293 = ssub.s32 %s31, %s38
    %p294 = scmp.eq.s32.totalorder %s293, 0
    %s296 = sadd.s32 %s295, 1
    %s297 = scalar_select %p294, %s295, %s296
    %p300 = pneg %p294
    %p301 = scmp.eq.s32.totalorder %s23, 3
    %p302 = por %p300, %p301
    %p303 = scmp.ne.s32.totalorder %s295, %s298
    %p304 = scmp.eq.s32.totalorder %s23, 0
    %p305 = por %p303, %p304
    %p306 = scmp.ne.s32.totalorder %s295, %s298
    %p307 = scmp.eq.s32.totalorder %s28, 3
    %p308 = por %p306, %p307
    %p309 = scmp.ne.s32.totalorder %s298, %s299
    %p310 = scmp.eq.s32.totalorder %s28, 0
    %p311 = por %p309, %p310
    %p312 = scmp.ne.s32.totalorder %s298, %s299
    %p313 = scmp.eq.s32.totalorder %s29, 3
    %p314 = por %p312, %p313
    %p316 = scmp.ne.s32.totalorder %s299, %s315
    %p317 = scmp.eq.s32.totalorder %s29, 0
    %p318 = por %p316, %p317
    %s319 = ssub.s32 %s31, %s38
    %p320 = scmp.eq.s32.totalorder %s319, 0
    %s322 = sadd.s32 %s321, 1
    %s323 = scalar_select %p320, %s321, %s322
    %p326 = pneg %p320
    %p327 = scmp.eq.s32.totalorder %s23, 3
    %p328 = por %p326, %p327
    %p329 = scmp.ne.s32.totalorder %s321, %s324
    %p330 = scmp.eq.s32.totalorder %s23, 0
    %p331 = por %p329, %p330
    %p332 = scmp.ne.s32.totalorder %s321, %s324
    %p333 = scmp.eq.s32.totalorder %s28, 3
    %p334 = por %p332, %p333
    %p335 = scmp.ne.s32.totalorder %s324, %s325
    %p336 = scmp.eq.s32.totalorder %s28, 0
    %p337 = por %p335, %p336
    %p338 = scmp.ne.s32.totalorder %s324, %s325
    %p339 = scmp.eq.s32.totalorder %s29, 3
    %p340 = por %p338, %p339
    %p342 = scmp.ne.s32.totalorder %s325, %s341
    %p343 = scmp.eq.s32.totalorder %s29, 0
    %p344 = por %p342, %p343
    %s345 = ssub.s32 %s31, %s38
    %p346 = scmp.eq.s32.totalorder %s345, 0
    %s348 = sadd.s32 %s347, 1
    %s349 = scalar_select %p346, %s347, %s348
    %p352 = pneg %p346
    %p353 = scmp.eq.s32.totalorder %s23, 3
    %p354 = por %p352, %p353
    %p355 = scmp.ne.s32.totalorder %s347, %s350
    %p356 = scmp.eq.s32.totalorder %s23, 0
    %p357 = por %p355, %p356
    %p358 = scmp.ne.s32.totalorder %s347, %s350
    %p359 = scmp.eq.s32.totalorder %s28, 3
    %p360 = por %p358, %p359
    %p361 = scmp.ne.s32.totalorder %s350, %s351
    %p362 = scmp.eq.s32.totalorder %s28, 0
    %p363 = por %p361, %p362
    %p364 = scmp.ne.s32.totalorder %s350, %s351
    %p365 = scmp.eq.s32.totalorder %s29, 3
    %p366 = por %p364, %p365
    %p368 = scmp.ne.s32.totalorder %s351, %s367
    %p369 = scmp.eq.s32.totalorder %s29, 0
    %p370 = por %p368, %p369
    %s371 = ssub.s32 %s31, %s38
    %p372 = scmp.eq.s32.totalorder %s371, 0
    %s374 = sadd.s32 %s373, 1
    %s375 = scalar_select %p372, %s373, %s374
    %p378 = pneg %p372
    %p379 = scmp.eq.s32.totalorder %s23, 3
    %p380 = por %p378, %p379
    %p381 = scmp.ne.s32.totalorder %s373, %s376
    %p382 = scmp.eq.s32.totalorder %s23, 0
    %p383 = por %p381, %p382
    %p384 = scmp.ne.s32.totalorder %s373, %s376
    %p385 = scmp.eq.s32.totalorder %s28, 3
    %p386 = por %p384, %p385
    %p387 = scmp.ne.s32.totalorder %s376, %s377
    %p388 = scmp.eq.s32.totalorder %s28, 0
    %p389 = por %p387, %p388
    %p390 = scmp.ne.s32.totalorder %s376, %s377
    %p391 = scmp.eq.s32.totalorder %s29, 3
    %p392 = por %p390, %p391
    %p394 = scmp.ne.s32.totalorder %s377, %s393
    %p395 = scmp.eq.s32.totalorder %s29, 0
    %p396 = por %p394, %p395
    %s397 = ssub.s32 %s31, %s38
    %p398 = scmp.eq.s32.totalorder %s397, 0
    %s400 = sadd.s32 %s399, 1
    %s401 = scalar_select %p398, %s399, %s400
    %p404 = pneg %p398
    %p405 = scmp.eq.s32.totalorder %s23, 3
    %p406 = por %p404, %p405
    %p407 = scmp.ne.s32.totalorder %s399, %s402
    %p408 = scmp.eq.s32.totalorder %s23, 0
    %p409 = por %p407, %p408
    %p410 = scmp.ne.s32.totalorder %s399, %s402
    %p411 = scmp.eq.s32.totalorder %s28, 3
    %p412 = por %p410, %p411
    %p413 = scmp.ne.s32.totalorder %s402, %s403
    %p414 = scmp.eq.s32.totalorder %s28, 0
    %p415 = por %p413, %p414
    %p416 = scmp.ne.s32.totalorder %s402, %s403
    %p417 = scmp.eq.s32.totalorder %s29, 3
    %p418 = por %p416, %p417
    %p420 = scmp.ne.s32.totalorder %s403, %s419
    %p421 = scmp.eq.s32.totalorder %s29, 0
    %p422 = por %p420, %p421
    %s424 = sadd.s32 %s423, 1
    %p427 = scmp.eq.s32.totalorder %s23, 3
    %p428 = scmp.ne.s32.totalorder %s423, %s425
    %p429 = scmp.eq.s32.totalorder %s23, 0
    %p430 = por %p428, %p429
    %p431 = scmp.ne.s32.totalorder %s423, %s425
    %p432 = scmp.eq.s32.totalorder %s28, 3
    %p433 = por %p431, %p432
    %p434 = scmp.ne.s32.totalorder %s425, %s426
    %p435 = scmp.eq.s32.totalorder %s28, 0
    %p436 = por %p434, %p435
    %p437 = scmp.ne.s32.totalorder %s425, %s426
    %p438 = scmp.eq.s32.totalorder %s29, 3
    %p439 = por %p437, %p438
    %p441 = scmp.ne.s32.totalorder %s426, %s440
    %p442 = scmp.eq.s32.totalorder %s29, 0
    %p443 = por %p441, %p442
    %s445 = sadd.s32 %s444, 1
    %p448 = scmp.eq.s32.totalorder %s23, 3
    %p449 = scmp.ne.s32.totalorder %s444, %s446
    %p450 = scmp.eq.s32.totalorder %s23, 0
    %p451 = por %p449, %p450
    %p452 = scmp.ne.s32.totalorder %s444, %s446
    %p453 = scmp.eq.s32.totalorder %s28, 3
    %p454 = por %p452, %p453
    %p455 = scmp.ne.s32.totalorder %s446, %s447
    %p456 = scmp.eq.s32.totalorder %s28, 0
    %p457 = por %p455, %p456
    %p458 = scmp.ne.s32.totalorder %s446, %s447
    %p459 = scmp.eq.s32.totalorder %s29, 3
    %p460 = por %p458, %p459
    %p462 = scmp.ne.s32.totalorder %s447, %s461
    %p463 = scmp.eq.s32.totalorder %s29, 0
    %p464 = por %p462, %p463
    %s465 = ssub.s32 %s30, %s42
    %p466 = scmp.eq.s32.totalorder %s465, 0
    %s468 = sadd.s32 %s467, 1
    %s469 = scalar_select %p466, %s467, %s468
    %p472 = pneg %p466
    %p473 = scmp.eq.s32.totalorder %s23, 3
    %p474 = por %p472, %p473
    %p475 = scmp.ne.s32.totalorder %s467, %s470
    %p476 = scmp.eq.s32.totalorder %s23, 0
    %p477 = por %p475, %p476
    %p478 = scmp.ne.s32.totalorder %s467, %s470
    %p479 = scmp.eq.s32.totalorder %s28, 3
    %p480 = por %p478, %p479
    %p481 = scmp.ne.s32.totalorder %s470, %s471
    %p482 = scmp.eq.s32.totalorder %s28, 0
    %p483 = por %p481, %p482
    %p484 = scmp.ne.s32.totalorder %s470, %s471
    %p485 = scmp.eq.s32.totalorder %s29, 3
    %p486 = por %p484, %p485
    %p488 = scmp.ne.s32.totalorder %s471, %s487
    %p489 = scmp.eq.s32.totalorder %s29, 0
    %p490 = por %p488, %p489
    %p491 = scmp.le.s32.totalorder 1, %s23
    %p492 = scmp.lt.s32.totalorder %s23, 5
    %p493 = pnand %p491, %p492
    %p494 = pneg %p493
    // Predicated region
    $region9: #{vit_seg_forward.1} parent=5 // pred_check
      _
    $region10: #{vit_seg_forward.1} parent=5 // pred_check_branch
      %496 = sbr.rel (%p493) target = $region12
    $region11: #{vit_seg_forward.1} parent=5 // pred_region
      %s497 = ssub.s32 %s23, 1
      // Predicated region
      $region13: #{vit_seg_forward.1} parent=11 // pred_check
        %p498 = pneg %p82
      $region14: #{vit_seg_forward.1} parent=11 // pred_check_branch
        %500 = sbr.rel (%p498) target = $region16
      $region15: #{vit_seg_forward.1} parent=11 // pred_region
        _
      $region16: #{vit_seg_forward.1} parent=11 // pred_fallthru
        _
      // Predicated region
      $region17: #{vit_seg_forward.1} parent=11 // pred_check
        %p501 = pneg %p103
      $region18: #{vit_seg_forward.1} parent=11 // pred_check_branch
        %503 = sbr.rel (%p501) target = $region20
      $region19: #{vit_seg_forward.1} parent=11 // pred_region
        _
      $region20: #{vit_seg_forward.1} parent=11 // pred_fallthru
        _
      // Predicated region
      $region21: #{vit_seg_forward.1} parent=11 // pred_check
        %p504 = pneg %p436
      $region22: #{vit_seg_forward.1} parent=11 // pred_check_branch
        %506 = sbr.rel (%p504) target = $region24
      $region23: #{vit_seg_forward.1} parent=11 // pred_region
        _
      $region24: #{vit_seg_forward.1} parent=11 // pred_fallthru
        _
      // Predicated region
      $region25: #{vit_seg_forward.1} parent=11 // pred_check
        %p507 = pneg %p457
      $region26: #{vit_seg_forward.1} parent=11 // pred_check_branch
        %509 = sbr.rel (%p507) target = $region28
      $region27: #{vit_seg_forward.1} parent=11 // pred_region
        _
      $region28: #{vit_seg_forward.1} parent=11 // pred_fallthru
        _
    $region12: #{vit_seg_forward.1} parent=5 // pred_fallthru
      _
    %p510 = scmp.lt.s32.totalorder %s23, 4
    // Predicated region
    $region29: #{vit_seg_forward.1} parent=5 // pred_check
      %p511 = pneg %p510
    $region30: #{vit_seg_forward.1} parent=5 // pred_check_branch
      %513 = sbr.rel (%p511) target = $region32
    $region31: #{vit_seg_forward.1} parent=5 // pred_region
      // Predicated region
      $region33: #{vit_seg_forward.1} parent=31 // pred_check
        %p514 = pneg %p55
      $region34: #{vit_seg_forward.1} parent=31 // pred_check_branch
        %516 = sbr.rel (%p514) target = $region36
      $region35: #{vit_seg_forward.1} parent=31 // pred_region
        %p517 = scmp.lt.s32.totalorder %s30, 1
        %s518 = scalar_select %p517, %s30, 1
        %s519 = smul.addr %s518, 2
        %s520 = smul.addr %s519, 8
        %s521 = scalar_lea.vmem %s0, %s520
      $region36: #{vit_seg_forward.1} parent=31 // pred_fallthru
        _
      // Predicated region
      $region37: #{vit_seg_forward.1} parent=31 // pred_check
        %p522 = pneg %p123
      $region38: #{vit_seg_forward.1} parent=31 // pred_check_branch
        %524 = sbr.rel (%p522) target = $region40
      $region39: #{vit_seg_forward.1} parent=31 // pred_region
        %p525 = scmp.lt.s32.totalorder %s31, 1
        %s526 = scalar_select %p525, %s31, 1
        %s527 = scalar_lea.vmem %s3, %s526
      $region40: #{vit_seg_forward.1} parent=31 // pred_fallthru
        _
      // Predicated region
      $region41: #{vit_seg_forward.1} parent=31 // pred_check
        %p528 = pneg %p149
      $region42: #{vit_seg_forward.1} parent=31 // pred_check_branch
        %530 = sbr.rel (%p528) target = $region44
      $region43: #{vit_seg_forward.1} parent=31 // pred_region
        %p531 = scmp.lt.s32.totalorder %s31, 1
        %s532 = scalar_select %p531, %s31, 1
        %s533 = scalar_lea.vmem %s4, %s532
      $region44: #{vit_seg_forward.1} parent=31 // pred_fallthru
        _
      // Predicated region
      $region45: #{vit_seg_forward.1} parent=31 // pred_check
        %p534 = pneg %p175
      $region46: #{vit_seg_forward.1} parent=31 // pred_check_branch
        %536 = sbr.rel (%p534) target = $region48
      $region47: #{vit_seg_forward.1} parent=31 // pred_region
        %p537 = scmp.lt.s32.totalorder %s31, 1
        %s538 = scalar_select %p537, %s31, 1
        %s539 = smul.addr %s538, 4
        %s540 = smul.addr %s539, 4
        %s541 = scalar_lea.vmem %s5, %s540
      $region48: #{vit_seg_forward.1} parent=31 // pred_fallthru
        _
      // Predicated region
      $region49: #{vit_seg_forward.1} parent=31 // pred_check
        %p542 = pneg %p201
      $region50: #{vit_seg_forward.1} parent=31 // pred_check_branch
        %544 = sbr.rel (%p542) target = $region52
      $region51: #{vit_seg_forward.1} parent=31 // pred_region
        %p545 = scmp.lt.s32.totalorder %s31, 1
        %s546 = scalar_select %p545, %s31, 1
        %s547 = scalar_lea.vmem %s6, %s546
      $region52: #{vit_seg_forward.1} parent=31 // pred_fallthru
        _
      // Predicated region
      $region53: #{vit_seg_forward.1} parent=31 // pred_check
        %p548 = pneg %p227
      $region54: #{vit_seg_forward.1} parent=31 // pred_check_branch
        %550 = sbr.rel (%p548) target = $region56
      $region55: #{vit_seg_forward.1} parent=31 // pred_region
        %p551 = scmp.lt.s32.totalorder %s31, 1
        %s552 = scalar_select %p551, %s31, 1
        %s553 = smul.addr %s552, 4
        %s554 = smul.addr %s553, 4
        %s555 = scalar_lea.vmem %s7, %s554
      $region56: #{vit_seg_forward.1} parent=31 // pred_fallthru
        _
      // Predicated region
      $region57: #{vit_seg_forward.1} parent=31 // pred_check
        %p556 = pneg %p253
      $region58: #{vit_seg_forward.1} parent=31 // pred_check_branch
        %558 = sbr.rel (%p556) target = $region60
      $region59: #{vit_seg_forward.1} parent=31 // pred_region
        %p559 = scmp.lt.s32.totalorder %s31, 1
        %s560 = scalar_select %p559, %s31, 1
        %s561 = scalar_lea.vmem %s8, %s560
      $region60: #{vit_seg_forward.1} parent=31 // pred_fallthru
        _
      // Predicated region
      $region61: #{vit_seg_forward.1} parent=31 // pred_check
        %p562 = pneg %p279
      $region62: #{vit_seg_forward.1} parent=31 // pred_check_branch
        %564 = sbr.rel (%p562) target = $region64
      $region63: #{vit_seg_forward.1} parent=31 // pred_region
        %p565 = scmp.lt.s32.totalorder %s31, 1
        %s566 = scalar_select %p565, %s31, 1
        %s567 = scalar_lea.vmem %s9, %s566
      $region64: #{vit_seg_forward.1} parent=31 // pred_fallthru
        _
      // Predicated region
      $region65: #{vit_seg_forward.1} parent=31 // pred_check
        %p568 = pneg %p305
      $region66: #{vit_seg_forward.1} parent=31 // pred_check_branch
        %570 = sbr.rel (%p568) target = $region68
      $region67: #{vit_seg_forward.1} parent=31 // pred_region
        %p571 = scmp.lt.s32.totalorder %s31, 1
        %s572 = scalar_select %p571, %s31, 1
        %s573 = scalar_lea.vmem %s10, %s572
      $region68: #{vit_seg_forward.1} parent=31 // pred_fallthru
        _
      // Predicated region
      $region69: #{vit_seg_forward.1} parent=31 // pred_check
        %p574 = pneg %p331
      $region70: #{vit_seg_forward.1} parent=31 // pred_check_branch
        %576 = sbr.rel (%p574) target = $region72
      $region71: #{vit_seg_forward.1} parent=31 // pred_region
        %p577 = scmp.lt.s32.totalorder %s31, 1
        %s578 = scalar_select %p577, %s31, 1
        %s579 = smul.addr %s578, 4
        %s580 = smul.addr %s579, 4
        %s581 = scalar_lea.vmem %s11, %s580
      $region72: #{vit_seg_forward.1} parent=31 // pred_fallthru
        _
      // Predicated region
      $region73: #{vit_seg_forward.1} parent=31 // pred_check
        %p582 = pneg %p357
      $region74: #{vit_seg_forward.1} parent=31 // pred_check_branch
        %584 = sbr.rel (%p582) target = $region76
      $region75: #{vit_seg_forward.1} parent=31 // pred_region
        %p585 = scmp.lt.s32.totalorder %s31, 1
        %s586 = scalar_select %p585, %s31, 1
        %s587 = scalar_lea.vmem %s12, %s586
      $region76: #{vit_seg_forward.1} parent=31 // pred_fallthru
        _
      // Predicated region
      $region77: #{vit_seg_forward.1} parent=31 // pred_check
        %p588 = pneg %p383
      $region78: #{vit_seg_forward.1} parent=31 // pred_check_branch
        %590 = sbr.rel (%p588) target = $region80
      $region79: #{vit_seg_forward.1} parent=31 // pred_region
        %p591 = scmp.lt.s32.totalorder %s31, 1
        %s592 = scalar_select %p591, %s31, 1
        %s593 = smul.addr %s592, 16
        %s594 = smul.addr %s593, 4
        %s595 = scalar_lea.vmem %s13, %s594
      $region80: #{vit_seg_forward.1} parent=31 // pred_fallthru
        _
      // Predicated region
      $region81: #{vit_seg_forward.1} parent=31 // pred_check
        %p596 = pneg %p409
      $region82: #{vit_seg_forward.1} parent=31 // pred_check_branch
        %598 = sbr.rel (%p596) target = $region84
      $region83: #{vit_seg_forward.1} parent=31 // pred_region
        %p599 = scmp.lt.s32.totalorder %s31, 1
        %s600 = scalar_select %p599, %s31, 1
        %s601 = scalar_lea.vmem %s14, %s600
      $region84: #{vit_seg_forward.1} parent=31 // pred_fallthru
        _
    $region32: #{vit_seg_forward.1} parent=5 // pred_fallthru
      _
    %p602 = scmp.le.s32.totalorder 1, %s23
    %p603 = scmp.lt.s32.totalorder %s23, 5
    %p604 = pnand %p602, %p603
    %p605 = pneg %p604
    // Predicated region
    $region85: #{vit_seg_forward.1} parent=5 // pred_check
      _
    $region86: #{vit_seg_forward.1} parent=5 // pred_check_branch
      %607 = sbr.rel (%p604) target = $region88
    $region87: #{vit_seg_forward.1} parent=5 // pred_region
      %s608 = ssub.s32 %s23, 1
      %p609 = scmp.lt.s32.totalorder %s32, 1
      %s610 = scalar_select %p609, %s32, 1
      %s611 = smul.addr %s610, 2
      %s612 = smul.addr %s611, 8
      %s613 = scalar_lea.vmem %s0, %s612
      %p614 = pneg %p61
      %p615 = pneg %p58
      %p616 = pneg %p82
      %p617 = pneg %p79
      %p618 = pneg %p103
      %p619 = pneg %p100
      %p620 = scmp.lt.s32.totalorder %s33, 1
      %s621 = scalar_select %p620, %s33, 1
      %s622 = scalar_lea.vmem %s3, %s621
      %p623 = pneg %p129
      %p624 = pneg %p126
      %p625 = scmp.lt.s32.totalorder %s33, 1
      %s626 = scalar_select %p625, %s33, 1
      %s627 = scalar_lea.vmem %s4, %s626
      %p628 = pneg %p155
      %p629 = pneg %p152
      %p630 = scmp.lt.s32.totalorder %s33, 1
      %s631 = scalar_select %p630, %s33, 1
      %s632 = smul.addr %s631, 4
      %s633 = smul.addr %s632, 4
      %s634 = scalar_lea.vmem %s5, %s633
      %p635 = pneg %p181
      %p636 = pneg %p178
      %p637 = scmp.lt.s32.totalorder %s33, 1
      %s638 = scalar_select %p637, %s33, 1
      %s639 = scalar_lea.vmem %s6, %s638
      %p640 = pneg %p207
      %p641 = pneg %p204
      %p642 = scmp.lt.s32.totalorder %s33, 1
      %s643 = scalar_select %p642, %s33, 1
      %s644 = smul.addr %s643, 4
      %s645 = smul.addr %s644, 4
      %s646 = scalar_lea.vmem %s7, %s645
      %p647 = pneg %p233
      %p648 = pneg %p230
      %p649 = scmp.lt.s32.totalorder %s33, 1
      %s650 = scalar_select %p649, %s33, 1
      %s651 = scalar_lea.vmem %s8, %s650
      %p652 = pneg %p259
      %p653 = pneg %p256
      %p654 = scmp.lt.s32.totalorder %s33, 1
      %s655 = scalar_select %p654, %s33, 1
      %s656 = scalar_lea.vmem %s9, %s655
      %p657 = pneg %p285
      %p658 = pneg %p282
      %p659 = scmp.lt.s32.totalorder %s33, 1
      %s660 = scalar_select %p659, %s33, 1
      %s661 = scalar_lea.vmem %s10, %s660
      %p662 = pneg %p311
      %p663 = pneg %p308
      %p664 = scmp.lt.s32.totalorder %s33, 1
      %s665 = scalar_select %p664, %s33, 1
      %s666 = smul.addr %s665, 4
      %s667 = smul.addr %s666, 4
      %s668 = scalar_lea.vmem %s11, %s667
      %p669 = pneg %p337
      %p670 = pneg %p334
      %p671 = scmp.lt.s32.totalorder %s33, 1
      %s672 = scalar_select %p671, %s33, 1
      %s673 = scalar_lea.vmem %s12, %s672
      %p674 = pneg %p363
      %p675 = pneg %p360
      %p676 = scmp.lt.s32.totalorder %s33, 1
      %s677 = scalar_select %p676, %s33, 1
      %s678 = smul.addr %s677, 16
      %s679 = smul.addr %s678, 4
      %s680 = scalar_lea.vmem %s13, %s679
      %p681 = pneg %p389
      %p682 = pneg %p386
      %p683 = scmp.lt.s32.totalorder %s33, 1
      %s684 = scalar_select %p683, %s33, 1
      %s685 = scalar_lea.vmem %s14, %s684
      %p686 = pneg %p415
      %p687 = pneg %p412
      %p688 = pneg %p436
      %p689 = pneg %p433
      %p690 = pneg %p457
      %p691 = pneg %p454
      %p692 = pneg %p483
      %p693 = pneg %p480
      %p694 = scmp.lt.s32.totalorder %s32, 1
      %s695 = scalar_select %p694, %s32, 1
      %s696 = smul.addr %s695, 2
      %s697 = smul.addr %s696, 8
      %s698 = scalar_lea.vmem %s17, %s697
      %p699 = scmp.lt.s32.totalorder %s32, 1
      %s700 = scalar_select %p699, %s32, 1
      %s701 = smul.addr %s700, 2
      %s702 = smul.addr %s701, 8
      %s703 = scalar_lea.vmem %s0, %s702
      %p704 = scmp.lt.s32.totalorder %s33, 1
      %s705 = scalar_select %p704, %s33, 1
      %s706 = scalar_lea.vmem %s3, %s705
      %p707 = scmp.lt.s32.totalorder %s33, 1
      %s708 = scalar_select %p707, %s33, 1
      %s709 = scalar_lea.vmem %s4, %s708
      %p710 = scmp.lt.s32.totalorder %s33, 1
      %s711 = scalar_select %p710, %s33, 1
      %s712 = smul.addr %s711, 4
      %s713 = smul.addr %s712, 4
      %s714 = scalar_lea.vmem %s5, %s713
      %p715 = scmp.lt.s32.totalorder %s33, 1
      %s716 = scalar_select %p715, %s33, 1
      %s717 = scalar_lea.vmem %s6, %s716
      %p718 = scmp.lt.s32.totalorder %s33, 1
      %s719 = scalar_select %p718, %s33, 1
      %s720 = smul.addr %s719, 4
      %s721 = smul.addr %s720, 4
      %s722 = scalar_lea.vmem %s7, %s721
      %p723 = scmp.lt.s32.totalorder %s33, 1
      %s724 = scalar_select %p723, %s33, 1
      %s725 = scalar_lea.vmem %s8, %s724
      %p726 = scmp.lt.s32.totalorder %s33, 1
      %s727 = scalar_select %p726, %s33, 1
      %s728 = scalar_lea.vmem %s9, %s727
      %p729 = scmp.lt.s32.totalorder %s33, 1
      %s730 = scalar_select %p729, %s33, 1
      %s731 = scalar_lea.vmem %s10, %s730
      %p732 = scmp.lt.s32.totalorder %s33, 1
      %s733 = scalar_select %p732, %s33, 1
      %s734 = smul.addr %s733, 4
      %s735 = smul.addr %s734, 4
      %s736 = scalar_lea.vmem %s11, %s735
      %p737 = scmp.lt.s32.totalorder %s33, 1
      %s738 = scalar_select %p737, %s33, 1
      %s739 = scalar_lea.vmem %s12, %s738
      %p740 = scmp.lt.s32.totalorder %s33, 1
      %s741 = scalar_select %p740, %s33, 1
      %s742 = smul.addr %s741, 16
      %s743 = smul.addr %s742, 4
      %s744 = scalar_lea.vmem %s13, %s743
      %p745 = scmp.lt.s32.totalorder %s33, 1
      %s746 = scalar_select %p745, %s33, 1
      %s747 = scalar_lea.vmem %s14, %s746
      %p748 = scmp.lt.s32.totalorder %s32, 1
      %s749 = scalar_select %p748, %s32, 1
      %s750 = smul.addr %s749, 2
      %s751 = smul.addr %s750, 8
      %s752 = scalar_lea.vmem %s17, %s751
      %p754 = scmp.eq.s32.totalorder %s33, 0
      // Predicated region
      $region89: #{vit_seg_forward.1} parent=87 // pred_check
        %p755 = pneg %p754
      $region90: #{vit_seg_forward.1} parent=87 // pred_check_branch
        %757 = sbr.rel (%p755) target = $region92
      $region91: #{vit_seg_forward.1} parent=87 // pred_region
        %v758 = vld [vmem:[%s703] sm:$0xff]
        %v759 = vld [vmem:[%s703 + $0x8] sm:$0xff]
        %v760 = vld [vmem:[%s1] sm:$0xf]
        %v761 = vld [vmem:[%s1 + $0x4] sm:$0xf]
        %v762 = vld [vmem:[%s1 + $0x8] sm:$0xf]
        %v763 = vld [vmem:[%s1 + $0xc] sm:$0xf]
        %v764 = vld [vmem:[%s1 + $0x10] sm:$0xf]
        %v765 = vld [vmem:[%s1 + $0x14] sm:$0xf]
        %v766 = vld [vmem:[%s1 + $0x18] sm:$0xf]
        %v767 = vld [vmem:[%s1 + $0x1c] sm:$0xf]
        %v768 = vpack.c.bf16 %v759, %v758
        %v769 = vld [vmem:[%s2] sm:$0xff]
        %v770 = vld [vmem:[%s2 + $0x8] sm:$0xff]
        %v779 = vunpack.c.l.b16 %v760
        %v780 = vunpack.c.l.b16 %v761
        %v781 = vunpack.c.l.b16 %v762
        %v782 = vunpack.c.l.b16 %v763
        %v783 = vunpack.c.l.b16 %v764
        %v784 = vunpack.c.l.b16 %v765
        %v785 = vunpack.c.l.b16 %v766
        %v786 = vunpack.c.l.b16 %v767
        %v787 = vpack.c.b16 %v780, %v779
        %v788 = vpack.c.b16 %v782, %v781
        %v789 = vpack.c.b16 %v784, %v783
        %v790 = vpack.c.b16 %v786, %v785
        %vm795 = vcmask 523264
        %v797 = vsel %vm795, %v768, 0
        %799 = vmatprep.subr.bf16.mxu0 0
        %800 = vmatpush1.bf16.msra.mxu0 %v787
        %801 = vmatprep.subr.bf16.mxu0 0
        %802 = vmatpush1.bf16.msra.mxu0 %v788
        %803 = vmatprep.subr.bf16.mxu0 0
        %804 = vmatpush1.bf16.msra.mxu0 %v789
        %805 = vmatprep.subr.bf16.mxu0 0
        %806 = vmatpush1.bf16.msra.mxu0 %v790
        %807 = vmatprep.subr.bf16.mxu0 0
        %808 = vmatpush1.bf16.msra.mxu0 0
        %809 = vmatprep.subr.bf16.mxu0 0
        %810 = vmatpush1.bf16.msra.mxu0 0
        %811 = vmatprep.subr.bf16.mxu0 0
        %812 = vmatpush1.bf16.msra.mxu0 0
        %813 = vmatprep.subr.bf16.mxu0 0
        %814 = vmatpush1.bf16.msra.mxu0 0
        %815 = vmatprep.subr.bf16.mxu0 0
        %816 = vmatpush1.bf16.msra.mxu0 0
        %817 = vmatprep.subr.bf16.mxu0 0
        %818 = vmatpush1.bf16.msra.mxu0 0
        %819 = vmatprep.subr.bf16.mxu0 0
        %820 = vmatpush1.bf16.msra.mxu0 0
        %821 = vmatprep.subr.bf16.mxu0 0
        %822 = vmatpush1.bf16.msra.mxu0 0
        %823 = vmatprep.subr.bf16.mxu0 0
        %824 = vmatpush1.bf16.msra.mxu0 0
        %825 = vmatprep.subr.bf16.mxu0 0
        %826 = vmatpush1.bf16.msra.mxu0 0
        %827 = vmatprep.subr.bf16.mxu0 0
        %828 = vmatpush1.bf16.msra.mxu0 0
        %829 = vmatprep.subr.bf16.mxu0 0
        %830 = vmatpush1.bf16.msra.mxu0 0
        %831 = vmatprep.mubr.bf16.mxu0 0
        %832 = vmatmul.mubr.bf16.gmra.mrb[0].mxu0 %v797
        %v833 = vpop.f32.mrb[0].mxu0
        %v834 = vadd.f32 %v769, %v833
        %v835 = vpop.f32.mrb[0].mxu0
        %v836 = vpop.f32.mrb[0].mxu0
        %v837 = vadd.f32 %v770, %v836
        %v838 = vpop.f32.mrb[0].mxu0
        %839 = vdwg.mxu0
        %vm840 = vcmask 261120
        %841 = vst.msk [vmem:[#allocation2] sm:$0xff] %vm840, %v834
        %842 = vst.msk [vmem:[#allocation2 + $0x8] sm:$0xff] %vm840, %v837
      $region92: #{vit_seg_forward.1} parent=87 // pred_fallthru
        _
      %v843 = vld [vmem:[#allocation2] sm:$0xff]
      %v844 = vld [vmem:[#allocation2 + $0x8] sm:$0xff]
      %v845 = vld [vmem:[%s706] sm:$0x1]
      %v846 = vld [vmem:[%s709] sm:$0x1]
      %vm847 = vcmask 261120
      %v848 = vsel %vm847, %v843, 0.0
      %849 = vadd.xlane.f32.xlu0 %v848
      %v850 = vpop.xlane.xlu0 %849
      %v851 = vsel %vm847, %v844, 0.0
      %852 = vadd.xlane.f32.xlu0 %v851
      %v853 = vpop.xlane.xlu0 %852
      %v854 = vrcp.pop 32.0
      %v855 = vmul.f32 %v850, %v854
      %v856 = vmul.f32 %v853, %v854
      %v857 = vsub.f32 %v843, %v855
      %v858 = vsub.f32 %v844, %v856
      %v859 = vmul.f32 %v857, %v857
      %v860 = vmul.f32 %v858, %v858
      %v861 = vsel %vm847, %v859, 0.0
      %862 = vadd.xlane.f32.xlu0 %v861
      %v863 = vpop.xlane.xlu0 %862
      %v864 = vsel %vm847, %v860, 0.0
      %865 = vadd.xlane.f32.xlu0 %v864
      %v866 = vpop.xlane.xlu0 %865
      %v867 = vmul.f32 %v863, %v854
      %v868 = vmul.f32 %v866, %v854
      %v869 = vadd.f32 %v867, 1e-05
      %v870 = vadd.f32 %v868, 1e-05
      %v871 = vrsqrt.pop %v869
      %v872 = vrsqrt.pop %v870
      %v873 = vmul.f32 %v857, %v871
      %v874 = vmul.f32 %v858, %v872
      %v876 = vlaneseq
      %v877 = vshrl.u32 %v876, 7
      %v878 = vsub.s32 0, %v877
      %v879 = vrot.slane %v845, %v878
      %v881 = vmul.f32 %v873, %v879
      %v882 = vmul.f32 %v874, %v879
      %v884 = vlaneseq
      %v885 = vshrl.u32 %v884, 7
      %v886 = vsub.s32 0, %v885
      %v887 = vrot.slane %v846, %v886
      %v889 = vadd.f32 %v881, %v887
      %v890 = vadd.f32 %v882, %v887
      %v891 = vld [vmem:[%s714] sm:$0xf]
      %v892 = vld [vmem:[%s714 + $0x4] sm:$0xf]
      %v893 = vld [vmem:[%s714 + $0x8] sm:$0xf]
      %v894 = vld [vmem:[%s714 + $0xc] sm:$0xf]
      %v895 = vpack.c.bf16 %v890, %v889
      %v896 = vld [vmem:[%s717] sm:$0x1]
      %v898 = vlaneseq
      %v899 = vshrl.u32 %v898, 7
      %v900 = vsub.s32 0, %v899
      %v901 = vrot.slane %v896, %v900
      %v907 = vunpack.c.l.b16 %v891
      %v908 = vunpack.c.l.b16 %v892
      %v909 = vunpack.c.l.b16 %v893
      %v910 = vunpack.c.l.b16 %v894
      %v911 = vpack.c.b16 %v908, %v907
      %v912 = vpack.c.b16 %v910, %v909
      %v916 = vsel %vm847, %v895, 0
      %918 = vmatprep.subr.bf16.mxu0 0
      %919 = vmatpush1.bf16.msra.mxu0 %v911
      %920 = vmatprep.subr.bf16.mxu0 0
      %921 = vmatpush1.bf16.msra.mxu0 %v912
      %922 = vmatprep.subr.bf16.mxu0 0
      %923 = vmatpush1.bf16.msra.mxu0 0
      %924 = vmatprep.subr.bf16.mxu0 0
      %925 = vmatpush1.bf16.msra.mxu0 0
      %926 = vmatprep.subr.bf16.mxu0 0
      %927 = vmatpush1.bf16.msra.mxu0 0
      %928 = vmatprep.subr.bf16.mxu0 0
      %929 = vmatpush1.bf16.msra.mxu0 0
      %930 = vmatprep.subr.bf16.mxu0 0
      %931 = vmatpush1.bf16.msra.mxu0 0
      %932 = vmatprep.subr.bf16.mxu0 0
      %933 = vmatpush1.bf16.msra.mxu0 0
      %934 = vmatprep.subr.bf16.mxu0 0
      %935 = vmatpush1.bf16.msra.mxu0 0
      %936 = vmatprep.subr.bf16.mxu0 0
      %937 = vmatpush1.bf16.msra.mxu0 0
      %938 = vmatprep.subr.bf16.mxu0 0
      %939 = vmatpush1.bf16.msra.mxu0 0
      %940 = vmatprep.subr.bf16.mxu0 0
      %941 = vmatpush1.bf16.msra.mxu0 0
      %942 = vmatprep.subr.bf16.mxu0 0
      %943 = vmatpush1.bf16.msra.mxu0 0
      %944 = vmatprep.subr.bf16.mxu0 0
      %945 = vmatpush1.bf16.msra.mxu0 0
      %946 = vmatprep.subr.bf16.mxu0 0
      %947 = vmatpush1.bf16.msra.mxu0 0
      %948 = vmatprep.subr.bf16.mxu0 0
      %949 = vmatpush1.bf16.msra.mxu0 0
      %950 = vmatprep.mubr.bf16.mxu0 0
      %951 = vmatmul.mubr.bf16.gmra.mrb[0].mxu0 %v916
      %v952 = vpop.f32.mrb[0].mxu0
      %v953 = vadd.f32 %v901, %v952
      %v954 = vpop.f32.mrb[0].mxu0
      %v955 = vpop.f32.mrb[0].mxu0
      %v956 = vadd.f32 %v901, %v955
      %v957 = vpop.f32.mrb[0].mxu0
      %958 = vdwg.mxu0
      %v959 = vmul.f32 %v953, 0.35355338
      %v960 = vmul.f32 %v956, 0.35355338
      %v961 = vpack.c.bf16 %v960, %v959
      %v962 = vpack.c.bf16 %v956, %v953
      %964 = vrot.lane.b32.xlu0 %v962, 96
      %v965 = vpop.permute.xlu0 %964
      %vm966 = vcmask 64512
      %v968 = vsel %vm966, %v961, 0
      %v971 = vsel %vm966, %v965, 0
      %973 = vmatprep.subr.bf16.mxu0 0
      %974 = vmatpush1.bf16.xpose.msra.mxu0 %v971
      %975 = vmatprep.subr.bf16.mxu0 0
      %976 = vmatpush1.bf16.xpose.msra.mxu0 0
      %977 = vmatprep.subr.bf16.mxu0 0
      %978 = vmatpush1.bf16.xpose.msra.mxu0 0
      %979 = vmatprep.subr.bf16.mxu0 0
      %980 = vmatpush1.bf16.xpose.msra.mxu0 0
      %981 = vmatprep.subr.bf16.mxu0 0
      %982 = vmatpush1.bf16.xpose.msra.mxu0 0
      %983 = vmatprep.subr.bf16.mxu0 0
      %984 = vmatpush1.bf16.xpose.msra.mxu0 0
      %985 = vmatprep.subr.bf16.mxu0 0
      %986 = vmatpush1.bf16.xpose.msra.mxu0 0
      %987 = vmatprep.subr.bf16.mxu0 0
      %988 = vmatpush1.bf16.xpose.msra.mxu0 0
      %989 = vmatprep.subr.bf16.mxu0 0
      %990 = vmatpush1.bf16.xpose.msra.mxu0 0
      %991 = vmatprep.subr.bf16.mxu0 0
      %992 = vmatpush1.bf16.xpose.msra.mxu0 0
      %993 = vmatprep.subr.bf16.mxu0 0
      %994 = vmatpush1.bf16.xpose.msra.mxu0 0
      %995 = vmatprep.subr.bf16.mxu0 0
      %996 = vmatpush1.bf16.xpose.msra.mxu0 0
      %997 = vmatprep.subr.bf16.mxu0 0
      %998 = vmatpush1.bf16.xpose.msra.mxu0 0
      %999 = vmatprep.subr.bf16.mxu0 0
      %1000 = vmatpush1.bf16.xpose.msra.mxu0 0
      %1001 = vmatprep.subr.bf16.mxu0 0
      %1002 = vmatpush1.bf16.xpose.msra.mxu0 0
      %1003 = vmatprep.subr.bf16.mxu0 0
      %1004 = vmatpush1.bf16.xpose.msra.mxu0 0
      %1005 = vmatprep.mubr.bf16.mxu0 0
      %1006 = vmatmul.mubr.bf16.gmra.mrb[0].mxu0 %v968
      %v1007 = vpop.f32.mrb[0].mxu0
      %v1008 = vadd.f32 0.0, %v1007
      %v1009 = vpop.f32.mrb[0].mxu0
      %v1010 = vpop.f32.mrb[0].mxu0
      %v1011 = vadd.f32 0.0, %v1010
      %v1012 = vpop.f32.mrb[0].mxu0
      %1013 = vdwg.mxu0
      %vm1014 = vcmask 130048
      %v1015 = vsel %vm1014, %v1008, -inf
      %1016 = vmax.xlane.f32.xlu0 %v1015
      %v1017 = vpop.xlane.xlu0 %1016
      %v1018 = vsel %vm1014, %v1011, -inf
      %1019 = vmax.xlane.f32.xlu0 %v1018
      %v1020 = vpop.xlane.xlu0 %1019
      %v1021 = vsub.f32 %v1008, %v1017
      %v1022 = vsub.f32 %v1011, %v1020
      %v1023 = vmul.f32 %v1021, 1.442695
      %v1024 = vpow.pop %v1023
      %v1025 = vmul.f32 %v1022, 1.442695
      %v1026 = vpow.pop %v1025
      %v1027 = vsel %vm1014, %v1024, 0.0
      %1028 = vadd.xlane.f32.xlu0 %v1027
      %v1029 = vpop.xlane.xlu0 %1028
      %v1030 = vsel %vm1014, %v1026, 0.0
      %1031 = vadd.xlane.f32.xlu0 %v1030
      %v1032 = vpop.xlane.xlu0 %1031
      %v1033 = vrcp.pop %v1029
      %v1034 = vrcp.pop %v1032
      %v1035 = vmul.f32 %v1024, %v1033
      %v1036 = vmul.f32 %v1026, %v1034
      %v1037 = vpack.c.bf16 %v1036, %v1035
      %1038 = vrot.lane.b32.xlu0 %v962, 64
      %v1039 = vpop.permute.xlu0 %1038
      %v1042 = vsel %vm1014, %v1037, 0
      %1044 = vmatprep.subr.bf16.mxu0 0
      %1045 = vmatpush1.bf16.msra.mxu0 %v1039
      %1046 = vmatprep.subr.bf16.mxu0 0
      %1047 = vmatpush1.bf16.msra.mxu0 0
      %1048 = vmatprep.subr.bf16.mxu0 0
      %1049 = vmatpush1.bf16.msra.mxu0 0
      %1050 = vmatprep.subr.bf16.mxu0 0
      %1051 = vmatpush1.bf16.msra.mxu0 0
      %1052 = vmatprep.subr.bf16.mxu0 0
      %1053 = vmatpush1.bf16.msra.mxu0 0
      %1054 = vmatprep.subr.bf16.mxu0 0
      %1055 = vmatpush1.bf16.msra.mxu0 0
      %1056 = vmatprep.subr.bf16.mxu0 0
      %1057 = vmatpush1.bf16.msra.mxu0 0
      %1058 = vmatprep.subr.bf16.mxu0 0
      %1059 = vmatpush1.bf16.msra.mxu0 0
      %1060 = vmatprep.subr.bf16.mxu0 0
      %1061 = vmatpush1.bf16.msra.mxu0 0
      %1062 = vmatprep.subr.bf16.mxu0 0
      %1063 = vmatpush1.bf16.msra.mxu0 0
      %1064 = vmatprep.subr.bf16.mxu0 0
      %1065 = vmatpush1.bf16.msra.mxu0 0
      %1066 = vmatprep.subr.bf16.mxu0 0
      %1067 = vmatpush1.bf16.msra.mxu0 0
      %1068 = vmatprep.subr.bf16.mxu0 0
      %1069 = vmatpush1.bf16.msra.mxu0 0
      %1070 = vmatprep.subr.bf16.mxu0 0
      %1071 = vmatpush1.bf16.msra.mxu0 0
      %1072 = vmatprep.subr.bf16.mxu0 0
      %1073 = vmatpush1.bf16.msra.mxu0 0
      %1074 = vmatprep.subr.bf16.mxu0 0
      %1075 = vmatpush1.bf16.msra.mxu0 0
      %1076 = vmatprep.mubr.bf16.mxu0 0
      %1077 = vmatmul.mubr.bf16.gmra.mrb[0].mxu0 %v1042
      %v1078 = vpop.f32.mrb[0].mxu0
      %v1079 = vadd.f32 0.0, %v1078
      %v1080 = vpop.f32.mrb[0].mxu0
      %v1081 = vpop.f32.mrb[0].mxu0
      %v1082 = vadd.f32 0.0, %v1081
      %v1083 = vpop.f32.mrb[0].mxu0
      %1084 = vdwg.mxu0
      %1085 = vst.msk [vmem:[#allocation3] sm:$0xff] %vm966, %v1079
      %1086 = vst.msk [vmem:[#allocation3 + $0x8] sm:$0xff] %vm966, %v1082
      %1088 = vrot.lane.b32.xlu0 %v961, 120
      %v1089 = vpop.permute.xlu0 %1088
      %1090 = vrot.lane.b32.xlu0 %v962, 88
      %v1091 = vpop.permute.xlu0 %1090
      %v1093 = vsel %vm966, %v1089, 0
      %v1096 = vsel %vm966, %v1091, 0
      %1098 = vmatprep.subr.bf16.mxu0 0
      %1099 = vmatpush1.bf16.xpose.msra.mxu0 %v1096
      %1100 = vmatprep.subr.bf16.mxu0 0
      %1101 = vmatpush1.bf16.xpose.msra.mxu0 0
      %1102 = vmatprep.subr.bf16.mxu0 0
      %1103 = vmatpush1.bf16.xpose.msra.mxu0 0
      %1104 = vmatprep.subr.bf16.mxu0 0
      %1105 = vmatpush1.bf16.xpose.msra.mxu0 0
      %1106 = vmatprep.subr.bf16.mxu0 0
      %1107 = vmatpush1.bf16.xpose.msra.mxu0 0
      %1108 = vmatprep.subr.bf16.mxu0 0
      %1109 = vmatpush1.bf16.xpose.msra.mxu0 0
      %1110 = vmatprep.subr.bf16.mxu0 0
      %1111 = vmatpush1.bf16.xpose.msra.mxu0 0
      %1112 = vmatprep.subr.bf16.mxu0 0
      %1113 = vmatpush1.bf16.xpose.msra.mxu0 0
      %1114 = vmatprep.subr.bf16.mxu0 0
      %1115 = vmatpush1.bf16.xpose.msra.mxu0 0
      %1116 = vmatprep.subr.bf16.mxu0 0
      %1117 = vmatpush1.bf16.xpose.msra.mxu0 0
      %1118 = vmatprep.subr.bf16.mxu0 0
      %1119 = vmatpush1.bf16.xpose.msra.mxu0 0
      %1120 = vmatprep.subr.bf16.mxu0 0
      %1121 = vmatpush1.bf16.xpose.msra.mxu0 0
      %1122 = vmatprep.subr.bf16.mxu0 0
      %1123 = vmatpush1.bf16.xpose.msra.mxu0 0
      %1124 = vmatprep.subr.bf16.mxu0 0
      %1125 = vmatpush1.bf16.xpose.msra.mxu0 0
      %1126 = vmatprep.subr.bf16.mxu0 0
      %1127 = vmatpush1.bf16.xpose.msra.mxu0 0
      %1128 = vmatprep.subr.bf16.mxu0 0
      %1129 = vmatpush1.bf16.xpose.msra.mxu0 0
      %1130 = vmatprep.mubr.bf16.mxu0 0
      %1131 = vmatmul.mubr.bf16.gmra.mrb[0].mxu0 %v1093
      %v1132 = vpop.f32.mrb[0].mxu0
      %v1133 = vadd.f32 0.0, %v1132
      %v1134 = vpop.f32.mrb[0].mxu0
      %v1135 = vpop.f32.mrb[0].mxu0
      %v1136 = vadd.f32 0.0, %v1135
      %v1137 = vpop.f32.mrb[0].mxu0
      %1138 = vdwg.mxu0
      %v1139 = vsel %vm1014, %v1133, -inf
      %1140 = vmax.xlane.f32.xlu0 %v1139
      %v1141 = vpop.xlane.xlu0 %1140
      %v1142 = vsel %vm1014, %v1136, -inf
      %1143 = vmax.xlane.f32.xlu0 %v1142
      %v1144 = vpop.xlane.xlu0 %1143
      %v1145 = vsub.f32 %v1133, %v1141
      %v1146 = vsub.f32 %v1136, %v1144
      %v1147 = vmul.f32 %v1145, 1.442695
      %v1148 = vpow.pop %v1147
      %v1149 = vmul.f32 %v1146, 1.442695
      %v1150 = vpow.pop %v1149
      %v1151 = vsel %vm1014, %v1148, 0.0
      %1152 = vadd.xlane.f32.xlu0 %v1151
      %v1153 = vpop.xlane.xlu0 %1152
      %v1154 = vsel %vm1014, %v1150, 0.0
      %1155 = vadd.xlane.f32.xlu0 %v1154
      %v1156 = vpop.xlane.xlu0 %1155
      %v1157 = vrcp.pop %v1153
      %v1158 = vrcp.pop %v1156
      %v1159 = vmul.f32 %v1148, %v1157
      %v1160 = vmul.f32 %v1150, %v1158
      %v1161 = vpack.c.bf16 %v1160, %v1159
      %1162 = vrot.lane.b32.xlu0 %v962, 56
      %v1163 = vpop.permute.xlu0 %1162
      %v1166 = vsel %vm1014, %v1161, 0
      %1168 = vmatprep.subr.bf16.mxu0 0
      %1169 = vmatpush1.bf16.msra.mxu0 %v1163
      %1170 = vmatprep.subr.bf16.mxu0 0
      %1171 = vmatpush1.bf16.msra.mxu0 0
      %1172 = vmatprep.subr.bf16.mxu0 0
      %1173 = vmatpush1.bf16.msra.mxu0 0
      %1174 = vmatprep.subr.bf16.mxu0 0
      %1175 = vmatpush1.bf16.msra.mxu0 0
      %1176 = vmatprep.subr.bf16.mxu0 0
      %1177 = vmatpush1.bf16.msra.mxu0 0
      %1178 = vmatprep.subr.bf16.mxu0 0
      %1179 = vmatpush1.bf16.msra.mxu0 0
      %1180 = vmatprep.subr.bf16.mxu0 0
      %1181 = vmatpush1.bf16.msra.mxu0 0
      %1182 = vmatprep.subr.bf16.mxu0 0
      %1183 = vmatpush1.bf16.msra.mxu0 0
      %1184 = vmatprep.subr.bf16.mxu0 0
      %1185 = vmatpush1.bf16.msra.mxu0 0
      %1186 = vmatprep.subr.bf16.mxu0 0
      %1187 = vmatpush1.bf16.msra.mxu0 0
      %1188 = vmatprep.subr.bf16.mxu0 0
      %1189 = vmatpush1.bf16.msra.mxu0 0
      %1190 = vmatprep.subr.bf16.mxu0 0
      %1191 = vmatpush1.bf16.msra.mxu0 0
      %1192 = vmatprep.subr.bf16.mxu0 0
      %1193 = vmatpush1.bf16.msra.mxu0 0
      %1194 = vmatprep.subr.bf16.mxu0 0
      %1195 = vmatpush1.bf16.msra.mxu0 0
      %1196 = vmatprep.subr.bf16.mxu0 0
      %1197 = vmatpush1.bf16.msra.mxu0 0
      %1198 = vmatprep.subr.bf16.mxu0 0
      %1199 = vmatpush1.bf16.msra.mxu0 0
      %1200 = vmatprep.mubr.bf16.mxu0 0
      %1201 = vmatmul.mubr.bf16.gmra.mrb[0].mxu0 %v1166
      %v1202 = vpop.f32.mrb[0].mxu0
      %v1203 = vadd.f32 0.0, %v1202
      %v1204 = vpop.f32.mrb[0].mxu0
      %v1205 = vpop.f32.mrb[0].mxu0
      %v1206 = vadd.f32 0.0, %v1205
      %v1207 = vpop.f32.mrb[0].mxu0
      %1208 = vdwg.mxu0
      %1211 = vrot.lane.b32.xlu0 %v1203, 8
      %v1212 = vpop.permute.xlu0 %1211
      %1213 = vrot.lane.b32.xlu0 %v1206, 8
      %v1214 = vpop.permute.xlu0 %1213
      %vm1217 = vcmask 130112
      %1218 = vst.msk [vmem:[#allocation3] sm:$0xff] %vm1217, %v1212
      %1219 = vst.msk [vmem:[#allocation3 + $0x8] sm:$0xff] %vm1217, %v1214
      %1220 = vrot.lane.b32.xlu0 %v961, 112
      %v1221 = vpop.permute.xlu0 %1220
      %1222 = vrot.lane.b32.xlu0 %v962, 80
      %v1223 = vpop.permute.xlu0 %1222
      %v1225 = vsel %vm966, %v1221, 0
      %v1228 = vsel %vm966, %v1223, 0
      %1230 = vmatprep.subr.bf16.mxu0 0
      %1231 = vmatpush1.bf16.xpose.msra.mxu0 %v1228
      %1232 = vmatprep.subr.bf16.mxu0 0
      %1233 = vmatpush1.bf16.xpose.msra.mxu0 0
      %1234 = vmatprep.subr.bf16.mxu0 0
      %1235 = vmatpush1.bf16.xpose.msra.mxu0 0
      %1236 = vmatprep.subr.bf16.mxu0 0
      %1237 = vmatpush1.bf16.xpose.msra.mxu0 0
      %1238 = vmatprep.subr.bf16.mxu0 0
      %1239 = vmatpush1.bf16.xpose.msra.mxu0 0
      %1240 = vmatprep.subr.bf16.mxu0 0
      %1241 = vmatpush1.bf16.xpose.msra.mxu0 0
      %1242 = vmatprep.subr.bf16.mxu0 0
      %1243 = vmatpush1.bf16.xpose.msra.mxu0 0
      %1244 = vmatprep.subr.bf16.mxu0 0
      %1245 = vmatpush1.bf16.xpose.msra.mxu0 0
      %1246 = vmatprep.subr.bf16.mxu0 0
      %1247 = vmatpush1.bf16.xpose.msra.mxu0 0
      %1248 = vmatprep.subr.bf16.mxu0 0
      %1249 = vmatpush1.bf16.xpose.msra.mxu0 0
      %1250 = vmatprep.subr.bf16.mxu0 0
      %1251 = vmatpush1.bf16.xpose.msra.mxu0 0
      %1252 = vmatprep.subr.bf16.mxu0 0
      %1253 = vmatpush1.bf16.xpose.msra.mxu0 0
      %1254 = vmatprep.subr.bf16.mxu0 0
      %1255 = vmatpush1.bf16.xpose.msra.mxu0 0
      %1256 = vmatprep.subr.bf16.mxu0 0
      %1257 = vmatpush1.bf16.xpose.msra.mxu0 0
      %1258 = vmatprep.subr.bf16.mxu0 0
      %1259 = vmatpush1.bf16.xpose.msra.mxu0 0
      %1260 = vmatprep.subr.bf16.mxu0 0
      %1261 = vmatpush1.bf16.xpose.msra.mxu0 0
      %1262 = vmatprep.mubr.bf16.mxu0 0
      %1263 = vmatmul.mubr.bf16.gmra.mrb[0].mxu0 %v1225
      %v1264 = vpop.f32.mrb[0].mxu0
      %v1265 = vadd.f32 0.0, %v1264
      %v1266 = vpop.f32.mrb[0].mxu0
      %v1267 = vpop.f32.mrb[0].mxu0
      %v1268 = vadd.f32 0.0, %v1267
      %v1269 = vpop.f32.mrb[0].mxu0
      %1270 = vdwg.mxu0
      %v1271 = vsel %vm1014, %v1265, -inf
      %1272 = vmax.xlane.f32.xlu0 %v1271
      %v1273 = vpop.xlane.xlu0 %1272
      %v1274 = vsel %vm1014, %v1268, -inf
      %1275 = vmax.xlane.f32.xlu0 %v1274
      %v1276 = vpop.xlane.xlu0 %1275
      %v1277 = vsub.f32 %v1265, %v1273
      %v1278 = vsub.f32 %v1268, %v1276
      %v1279 = vmul.f32 %v1277, 1.442695
      %v1280 = vpow.pop %v1279
      %v1281 = vmul.f32 %v1278, 1.442695
      %v1282 = vpow.pop %v1281
      %v1283 = vsel %vm1014, %v1280, 0.0
      %1284 = vadd.xlane.f32.xlu0 %v1283
      %v1285 = vpop.xlane.xlu0 %1284
      %v1286 = vsel %vm1014, %v1282, 0.0
      %1287 = vadd.xlane.f32.xlu0 %v1286
      %v1288 = vpop.xlane.xlu0 %1287
      %v1289 = vrcp.pop %v1285
      %v1290 = vrcp.pop %v1288
      %v1291 = vmul.f32 %v1280, %v1289
      %v1292 = vmul.f32 %v1282, %v1290
      %v1293 = vpack.c.bf16 %v1292, %v1291
      %1294 = vrot.lane.b32.xlu0 %v962, 48
      %v1295 = vpop.permute.xlu0 %1294
      %v1298 = vsel %vm1014, %v1293, 0
      %1300 = vmatprep.subr.bf16.mxu0 0
      %1301 = vmatpush1.bf16.msra.mxu0 %v1295
      %1302 = vmatprep.subr.bf16.mxu0 0
      %1303 = vmatpush1.bf16.msra.mxu0 0
      %1304 = vmatprep.subr.bf16.mxu0 0
      %1305 = vmatpush1.bf16.msra.mxu0 0
      %1306 = vmatprep.subr.bf16.mxu0 0
      %1307 = vmatpush1.bf16.msra.mxu0 0
      %1308 = vmatprep.subr.bf16.mxu0 0
      %1309 = vmatpush1.bf16.msra.mxu0 0
      %1310 = vmatprep.subr.bf16.mxu0 0
      %1311 = vmatpush1.bf16.msra.mxu0 0
      %1312 = vmatprep.subr.bf16.mxu0 0
      %1313 = vmatpush1.bf16.msra.mxu0 0
      %1314 = vmatprep.subr.bf16.mxu0 0
      %1315 = vmatpush1.bf16.msra.mxu0 0
      %1316 = vmatprep.subr.bf16.mxu0 0
      %1317 = vmatpush1.bf16.msra.mxu0 0
      %1318 = vmatprep.subr.bf16.mxu0 0
      %1319 = vmatpush1.bf16.msra.mxu0 0
      %1320 = vmatprep.subr.bf16.mxu0 0
      %1321 = vmatpush1.bf16.msra.mxu0 0
      %1322 = vmatprep.subr.bf16.mxu0 0
      %1323 = vmatpush1.bf16.msra.mxu0 0
      %1324 = vmatprep.subr.bf16.mxu0 0
      %1325 = vmatpush1.bf16.msra.mxu0 0
      %1326 = vmatprep.subr.bf16.mxu0 0
      %1327 = vmatpush1.bf16.msra.mxu0 0
      %1328 = vmatprep.subr.bf16.mxu0 0
      %1329 = vmatpush1.bf16.msra.mxu0 0
      %1330 = vmatprep.subr.bf16.mxu0 0
      %1331 = vmatpush1.bf16.msra.mxu0 0
      %1332 = vmatprep.mubr.bf16.mxu0 0
      %1333 = vmatmul.mubr.bf16.gmra.mrb[0].mxu0 %v1298
      %v1334 = vpop.f32.mrb[0].mxu0
      %v1335 = vadd.f32 0.0, %v1334
      %v1336 = vpop.f32.mrb[0].mxu0
      %v1337 = vpop.f32.mrb[0].mxu0
      %v1338 = vadd.f32 0.0, %v1337
      %v1339 = vpop.f32.mrb[0].mxu0
      %1340 = vdwg.mxu0
      %1343 = vrot.lane.b32.xlu0 %v1335, 16
      %v1344 = vpop.permute.xlu0 %1343
      %1345 = vrot.lane.b32.xlu0 %v1338, 16
      %v1346 = vpop.permute.xlu0 %1345
      %vm1349 = vcmask 195712
      %1350 = vst.msk [vmem:[#allocation3] sm:$0xff] %vm1349, %v1344
      %1351 = vst.msk [vmem:[#allocation3 + $0x8] sm:$0xff] %vm1349, %v1346
      %1352 = vrot.lane.b32.xlu0 %v961, 104
      %v1353 = vpop.permute.xlu0 %1352
      %1354 = vrot.lane.b32.xlu0 %v962, 72
      %v1355 = vpop.permute.xlu0 %1354
      %v1357 = vsel %vm966, %v1353, 0
      %v1360 = vsel %vm966, %v1355, 0
      %1362 = vmatprep.subr.bf16.mxu0 0
      %1363 = vmatpush1.bf16.xpose.msra.mxu0 %v1360
      %1364 = vmatprep.subr.bf16.mxu0 0
      %1365 = vmatpush1.bf16.xpose.msra.mxu0 0
      %1366 = vmatprep.subr.bf16.mxu0 0
      %1367 = vmatpush1.bf16.xpose.msra.mxu0 0
      %1368 = vmatprep.subr.bf16.mxu0 0
      %1369 = vmatpush1.bf16.xpose.msra.mxu0 0
      %1370 = vmatprep.subr.bf16.mxu0 0
      %1371 = vmatpush1.bf16.xpose.msra.mxu0 0
      %1372 = vmatprep.subr.bf16.mxu0 0
      %1373 = vmatpush1.bf16.xpose.msra.mxu0 0
      %1374 = vmatprep.subr.bf16.mxu0 0
      %1375 = vmatpush1.bf16.xpose.msra.mxu0 0
      %1376 = vmatprep.subr.bf16.mxu0 0
      %1377 = vmatpush1.bf16.xpose.msra.mxu0 0
      %1378 = vmatprep.subr.bf16.mxu0 0
      %1379 = vmatpush1.bf16.xpose.msra.mxu0 0
      %1380 = vmatprep.subr.bf16.mxu0 0
      %1381 = vmatpush1.bf16.xpose.msra.mxu0 0
      %1382 = vmatprep.subr.bf16.mxu0 0
      %1383 = vmatpush1.bf16.xpose.msra.mxu0 0
      %1384 = vmatprep.subr.bf16.mxu0 0
      %1385 = vmatpush1.bf16.xpose.msra.mxu0 0
      %1386 = vmatprep.subr.bf16.mxu0 0
      %1387 = vmatpush1.bf16.xpose.msra.mxu0 0
      %1388 = vmatprep.subr.bf16.mxu0 0
      %1389 = vmatpush1.bf16.xpose.msra.mxu0 0
      %1390 = vmatprep.subr.bf16.mxu0 0
      %1391 = vmatpush1.bf16.xpose.msra.mxu0 0
      %1392 = vmatprep.subr.bf16.mxu0 0
      %1393 = vmatpush1.bf16.xpose.msra.mxu0 0
      %1394 = vmatprep.mubr.bf16.mxu0 0
      %1395 = vmatmul.mubr.bf16.gmra.mrb[0].mxu0 %v1357
      %v1396 = vpop.f32.mrb[0].mxu0
      %v1397 = vadd.f32 0.0, %v1396
      %v1398 = vpop.f32.mrb[0].mxu0
      %v1399 = vpop.f32.mrb[0].mxu0
      %v1400 = vadd.f32 0.0, %v1399
      %v1401 = vpop.f32.mrb[0].mxu0
      %1402 = vdwg.mxu0
      %v1403 = vsel %vm1014, %v1397, -inf
      %1404 = vmax.xlane.f32.xlu0 %v1403
      %v1405 = vpop.xlane.xlu0 %1404
      %v1406 = vsel %vm1014, %v1400, -inf
      %1407 = vmax.xlane.f32.xlu0 %v1406
      %v1408 = vpop.xlane.xlu0 %1407
      %v1409 = vsub.f32 %v1397, %v1405
      %v1410 = vsub.f32 %v1400, %v1408
      %v1411 = vmul.f32 %v1409, 1.442695
      %v1412 = vpow.pop %v1411
      %v1413 = vmul.f32 %v1410, 1.442695
      %v1414 = vpow.pop %v1413
      %v1415 = vsel %vm1014, %v1412, 0.0
      %1416 = vadd.xlane.f32.xlu0 %v1415
      %v1417 = vpop.xlane.xlu0 %1416
      %v1418 = vsel %vm1014, %v1414, 0.0
      %1419 = vadd.xlane.f32.xlu0 %v1418
      %v1420 = vpop.xlane.xlu0 %1419
      %v1421 = vrcp.pop %v1417
      %v1422 = vrcp.pop %v1420
      %v1423 = vmul.f32 %v1412, %v1421
      %v1424 = vmul.f32 %v1414, %v1422
      %v1425 = vpack.c.bf16 %v1424, %v1423
      %1426 = vrot.lane.b32.xlu0 %v962, 40
      %v1427 = vpop.permute.xlu0 %1426
      %v1430 = vsel %vm1014, %v1425, 0
      %1432 = vmatprep.subr.bf16.mxu0 0
      %1433 = vmatpush1.bf16.msra.mxu0 %v1427
      %1434 = vmatprep.subr.bf16.mxu0 0
      %1435 = vmatpush1.bf16.msra.mxu0 0
      %1436 = vmatprep.subr.bf16.mxu0 0
      %1437 = vmatpush1.bf16.msra.mxu0 0
      %1438 = vmatprep.subr.bf16.mxu0 0
      %1439 = vmatpush1.bf16.msra.mxu0 0
      %1440 = vmatprep.subr.bf16.mxu0 0
      %1441 = vmatpush1.bf16.msra.mxu0 0
      %1442 = vmatprep.subr.bf16.mxu0 0
      %1443 = vmatpush1.bf16.msra.mxu0 0
      %1444 = vmatprep.subr.bf16.mxu0 0
      %1445 = vmatpush1.bf16.msra.mxu0 0
      %1446 = vmatprep.subr.bf16.mxu0 0
      %1447 = vmatpush1.bf16.msra.mxu0 0
      %1448 = vmatprep.subr.bf16.mxu0 0
      %1449 = vmatpush1.bf16.msra.mxu0 0
      %1450 = vmatprep.subr.bf16.mxu0 0
      %1451 = vmatpush1.bf16.msra.mxu0 0
      %1452 = vmatprep.subr.bf16.mxu0 0
      %1453 = vmatpush1.bf16.msra.mxu0 0
      %1454 = vmatprep.subr.bf16.mxu0 0
      %1455 = vmatpush1.bf16.msra.mxu0 0
      %1456 = vmatprep.subr.bf16.mxu0 0
      %1457 = vmatpush1.bf16.msra.mxu0 0
      %1458 = vmatprep.subr.bf16.mxu0 0
      %1459 = vmatpush1.bf16.msra.mxu0 0
      %1460 = vmatprep.subr.bf16.mxu0 0
      %1461 = vmatpush1.bf16.msra.mxu0 0
      %1462 = vmatprep.subr.bf16.mxu0 0
      %1463 = vmatpush1.bf16.msra.mxu0 0
      %1464 = vmatprep.mubr.bf16.mxu0 0
      %1465 = vmatmul.mubr.bf16.gmra.mrb[0].mxu0 %v1430
      %v1466 = vpop.f32.mrb[0].mxu0
      %v1467 = vadd.f32 0.0, %v1466
      %v1468 = vpop.f32.mrb[0].mxu0
      %v1469 = vpop.f32.mrb[0].mxu0
      %v1470 = vadd.f32 0.0, %v1469
      %v1471 = vpop.f32.mrb[0].mxu0
      %1472 = vdwg.mxu0
      %1475 = vrot.lane.b32.xlu0 %v1467, 24
      %v1476 = vpop.permute.xlu0 %1475
      %1477 = vrot.lane.b32.xlu0 %v1470, 24
      %v1478 = vpop.permute.xlu0 %1477
      %vm1481 = vcmask 261312
      %1482 = vst.msk [vmem:[#allocation3] sm:$0xff] %vm1481, %v1476
      %1483 = vst.msk [vmem:[#allocation3 + $0x8] sm:$0xff] %vm1481, %v1478
      %v1484 = vld [vmem:[#allocation3] sm:$0xff]
      %v1485 = vld [vmem:[#allocation3 + $0x8] sm:$0xff]
      %v1486 = vld [vmem:[%s722] sm:$0xf]
      %v1487 = vld [vmem:[%s722 + $0x4] sm:$0xf]
      %v1488 = vld [vmem:[%s722 + $0x8] sm:$0xf]
      %v1489 = vld [vmem:[%s722 + $0xc] sm:$0xf]
      %v1490 = vpack.c.bf16 %v1485, %v1484
      %v1491 = vld [vmem:[%s725] sm:$0x1]
      %v1493 = vlaneseq
      %v1494 = vshrl.u32 %v1493, 7
      %v1495 = vsub.s32 0, %v1494
      %v1496 = vrot.slane %v1491, %v1495
      %v1502 = vunpack.c.l.b16 %v1486
      %v1503 = vunpack.c.l.b16 %v1487
      %v1504 = vunpack.c.l.b16 %v1488
      %v1505 = vunpack.c.l.b16 %v1489
      %v1506 = vpack.c.b16 %v1503, %v1502
      %v1507 = vpack.c.b16 %v1505, %v1504
      %v1511 = vsel %vm847, %v1490, 0
      %1513 = vmatprep.subr.bf16.mxu0 0
      %1514 = vmatpush1.bf16.msra.mxu0 %v1506
      %1515 = vmatprep.subr.bf16.mxu0 0
      %1516 = vmatpush1.bf16.msra.mxu0 %v1507
      %1517 = vmatprep.subr.bf16.mxu0 0
      %1518 = vmatpush1.bf16.msra.mxu0 0
      %1519 = vmatprep.subr.bf16.mxu0 0
      %1520 = vmatpush1.bf16.msra.mxu0 0
      %1521 = vmatprep.subr.bf16.mxu0 0
      %1522 = vmatpush1.bf16.msra.mxu0 0
      %1523 = vmatprep.subr.bf16.mxu0 0
      %1524 = vmatpush1.bf16.msra.mxu0 0
      %1525 = vmatprep.subr.bf16.mxu0 0
      %1526 = vmatpush1.bf16.msra.mxu0 0
      %1527 = vmatprep.subr.bf16.mxu0 0
      %1528 = vmatpush1.bf16.msra.mxu0 0
      %1529 = vmatprep.subr.bf16.mxu0 0
      %1530 = vmatpush1.bf16.msra.mxu0 0
      %1531 = vmatprep.subr.bf16.mxu0 0
      %1532 = vmatpush1.bf16.msra.mxu0 0
      %1533 = vmatprep.subr.bf16.mxu0 0
      %1534 = vmatpush1.bf16.msra.mxu0 0
      %1535 = vmatprep.subr.bf16.mxu0 0
      %1536 = vmatpush1.bf16.msra.mxu0 0
      %1537 = vmatprep.subr.bf16.mxu0 0
      %1538 = vmatpush1.bf16.msra.mxu0 0
      %1539 = vmatprep.subr.bf16.mxu0 0
      %1540 = vmatpush1.bf16.msra.mxu0 0
      %1541 = vmatprep.subr.bf16.mxu0 0
      %1542 = vmatpush1.bf16.msra.mxu0 0
      %1543 = vmatprep.subr.bf16.mxu0 0
      %1544 = vmatpush1.bf16.msra.mxu0 0
      %1545 = vmatprep.mubr.bf16.mxu0 0
      %1546 = vmatmul.mubr.bf16.gmra.mrb[0].mxu0 %v1511
      %v1547 = vpop.f32.mrb[0].mxu0
      %v1548 = vadd.f32 %v1496, %v1547
      %v1549 = vpop.f32.mrb[0].mxu0
      %v1550 = vpop.f32.mrb[0].mxu0
      %v1551 = vadd.f32 %v1496, %v1550
      %v1552 = vpop.f32.mrb[0].mxu0
      %1553 = vdwg.mxu0
      %v1554 = vadd.f32 %v843, %v1548
      %v1555 = vadd.f32 %v844, %v1551
      %v1556 = vld [vmem:[%s728] sm:$0x1]
      %v1557 = vld [vmem:[%s731] sm:$0x1]
      %v1558 = vsel %vm847, %v1554, 0.0
      %1559 = vadd.xlane.f32.xlu0 %v1558
      %v1560 = vpop.xlane.xlu0 %1559
      %v1561 = vsel %vm847, %v1555, 0.0
      %1562 = vadd.xlane.f32.xlu0 %v1561
      %v1563 = vpop.xlane.xlu0 %1562
      %v1564 = vmul.f32 %v1560, %v854
      %v1565 = vmul.f32 %v1563, %v854
      %v1566 = vsub.f32 %v1554, %v1564
      %v1567 = vsub.f32 %v1555, %v1565
      %v1568 = vmul.f32 %v1566, %v1566
      %v1569 = vmul.f32 %v1567, %v1567
      %v1570 = vsel %vm847, %v1568, 0.0
      %1571 = vadd.xlane.f32.xlu0 %v1570
      %v1572 = vpop.xlane.xlu0 %1571
      %v1573 = vsel %vm847, %v1569, 0.0
      %1574 = vadd.xlane.f32.xlu0 %v1573
      %v1575 = vpop.xlane.xlu0 %1574
      %v1576 = vmul.f32 %v1572, %v854
      %v1577 = vmul.f32 %v1575, %v854
      %v1578 = vadd.f32 %v1576, 1e-05
      %v1579 = vadd.f32 %v1577, 1e-05
      %v1580 = vrsqrt.pop %v1578
      %v1581 = vrsqrt.pop %v1579
      %v1582 = vmul.f32 %v1566, %v1580
      %v1583 = vmul.f32 %v1567, %v1581
      %v1585 = vlaneseq
      %v1586 = vshrl.u32 %v1585, 7
      %v1587 = vsub.s32 0, %v1586
      %v1588 = vrot.slane %v1556, %v1587
      %v1590 = vmul.f32 %v1582, %v1588
      %v1591 = vmul.f32 %v1583, %v1588
      %v1593 = vlaneseq
      %v1594 = vshrl.u32 %v1593, 7
      %v1595 = vsub.s32 0, %v1594
      %v1596 = vrot.slane %v1557, %v1595
      %v1598 = vadd.f32 %v1590, %v1596
      %v1599 = vadd.f32 %v1591, %v1596
      %v1600 = vld [vmem:[%s736] sm:$0xf]
      %v1601 = vld [vmem:[%s736 + $0x4] sm:$0xf]
      %v1602 = vld [vmem:[%s736 + $0x8] sm:$0xf]
      %v1603 = vld [vmem:[%s736 + $0xc] sm:$0xf]
      %v1604 = vpack.c.bf16 %v1599, %v1598
      %v1605 = vld [vmem:[%s739] sm:$0x1]
      %v1607 = vlaneseq
      %v1608 = vshrl.u32 %v1607, 7
      %v1609 = vsub.s32 0, %v1608
      %v1610 = vrot.slane %v1605, %v1609
      %v1616 = vunpack.c.l.b16 %v1600
      %v1617 = vunpack.c.l.b16 %v1601
      %v1618 = vunpack.c.l.b16 %v1602
      %v1619 = vunpack.c.l.b16 %v1603
      %v1620 = vpack.c.b16 %v1617, %v1616
      %v1621 = vpack.c.b16 %v1619, %v1618
      %v1625 = vsel %vm847, %v1604, 0
      %1627 = vmatprep.subr.bf16.mxu0 0
      %1628 = vmatpush1.bf16.msra.mxu0 %v1620
      %1629 = vmatprep.subr.bf16.mxu0 0
      %1630 = vmatpush1.bf16.msra.mxu0 %v1621
      %1631 = vmatprep.subr.bf16.mxu0 0
      %1632 = vmatpush1.bf16.msra.mxu0 0
      %1633 = vmatprep.subr.bf16.mxu0 0
      %1634 = vmatpush1.bf16.msra.mxu0 0
      %1635 = vmatprep.subr.bf16.mxu0 0
      %1636 = vmatpush1.bf16.msra.mxu0 0
      %1637 = vmatprep.subr.bf16.mxu0 0
      %1638 = vmatpush1.bf16.msra.mxu0 0
      %1639 = vmatprep.subr.bf16.mxu0 0
      %1640 = vmatpush1.bf16.msra.mxu0 0
      %1641 = vmatprep.subr.bf16.mxu0 0
      %1642 = vmatpush1.bf16.msra.mxu0 0
      %1643 = vmatprep.subr.bf16.mxu0 0
      %1644 = vmatpush1.bf16.msra.mxu0 0
      %1645 = vmatprep.subr.bf16.mxu0 0
      %1646 = vmatpush1.bf16.msra.mxu0 0
      %1647 = vmatprep.subr.bf16.mxu0 0
      %1648 = vmatpush1.bf16.msra.mxu0 0
      %1649 = vmatprep.subr.bf16.mxu0 0
      %1650 = vmatpush1.bf16.msra.mxu0 0
      %1651 = vmatprep.subr.bf16.mxu0 0
      %1652 = vmatpush1.bf16.msra.mxu0 0
      %1653 = vmatprep.subr.bf16.mxu0 0
      %1654 = vmatpush1.bf16.msra.mxu0 0
      %1655 = vmatprep.subr.bf16.mxu0 0
      %1656 = vmatpush1.bf16.msra.mxu0 0
      %1657 = vmatprep.subr.bf16.mxu0 0
      %1658 = vmatpush1.bf16.msra.mxu0 0
      %1659 = vmatprep.mubr.bf16.mxu0 0
      %1660 = vmatmul.mubr.bf16.gmra.mrb[0].mxu0 %v1625
      %v1661 = vpop.f32.mrb[0].mxu0
      %v1662 = vadd.f32 %v1610, %v1661
      %v1663 = vpop.f32.mrb[0].mxu0
      %v1664 = vpop.f32.mrb[0].mxu0
      %v1665 = vadd.f32 %v1610, %v1664
      %v1666 = vpop.f32.mrb[0].mxu0
      %1667 = vdwg.mxu0
      %v1668 = vmul.f32 %v1662, 0.5
      %v1669 = vmul.f32 %v1665, 0.5
      %v1670 = vmul.f32 %v1662, 0.044715
      %v1671 = vmul.f32 %v1665, 0.044715
      %v1672 = vmul.f32 %v1670, %v1662
      %v1673 = vmul.f32 %v1671, %v1665
      %v1674 = vmul.f32 %v1672, %v1662
      %v1675 = vmul.f32 %v1673, %v1665
      %v1676 = vadd.f32 %v1662, %v1674
      %v1677 = vadd.f32 %v1665, %v1675
      %v1678 = vmul.f32 %v1676, 0.7978846
      %v1679 = vmul.f32 %v1677, 0.7978846
      %v1680 = vtanh.pop %v1678
      %v1681 = vtanh.pop %v1679
      %v1682 = vadd.f32 %v1680, 1.0
      %v1683 = vadd.f32 %v1681, 1.0
      %v1684 = vmul.f32 %v1668, %v1682
      %v1685 = vmul.f32 %v1669, %v1683
      %v1686 = vld [vmem:[%s744] sm:$0xf]
      %v1687 = vld [vmem:[%s744 + $0x4] sm:$0xf]
      %v1688 = vld [vmem:[%s744 + $0x8] sm:$0xf]
      %v1689 = vld [vmem:[%s744 + $0xc] sm:$0xf]
      %v1690 = vld [vmem:[%s744 + $0x10] sm:$0xf]
      %v1691 = vld [vmem:[%s744 + $0x14] sm:$0xf]
      %v1692 = vld [vmem:[%s744 + $0x18] sm:$0xf]
      %v1693 = vld [vmem:[%s744 + $0x1c] sm:$0xf]
      %v1694 = vld [vmem:[%s744 + $0x20] sm:$0xf]
      %v1695 = vld [vmem:[%s744 + $0x24] sm:$0xf]
      %v1696 = vld [vmem:[%s744 + $0x28] sm:$0xf]
      %v1697 = vld [vmem:[%s744 + $0x2c] sm:$0xf]
      %v1698 = vld [vmem:[%s744 + $0x30] sm:$0xf]
      %v1699 = vld [vmem:[%s744 + $0x34] sm:$0xf]
      %v1700 = vld [vmem:[%s744 + $0x38] sm:$0xf]
      %v1701 = vld [vmem:[%s744 + $0x3c] sm:$0xf]
      %v1702 = vpack.c.bf16 %v1685, %v1684
      %v1703 = vld [vmem:[%s747] sm:$0x1]
      %v1705 = vlaneseq
      %v1706 = vshrl.u32 %v1705, 7
      %v1707 = vsub.s32 0, %v1706
      %v1708 = vrot.slane %v1703, %v1707
      %v1726 = vunpack.c.l.b16 %v1686
      %v1727 = vunpack.c.l.b16 %v1687
      %v1728 = vunpack.c.l.b16 %v1688
      %v1729 = vunpack.c.l.b16 %v1689
      %v1730 = vunpack.c.l.b16 %v1690
      %v1731 = vunpack.c.l.b16 %v1691
      %v1732 = vunpack.c.l.b16 %v1692
      %v1733 = vunpack.c.l.b16 %v1693
      %v1734 = vunpack.c.l.b16 %v1694
      %v1735 = vunpack.c.l.b16 %v1695
      %v1736 = vunpack.c.l.b16 %v1696
      %v1737 = vunpack.c.l.b16 %v1697
      %v1738 = vunpack.c.l.b16 %v1698
      %v1739 = vunpack.c.l.b16 %v1699
      %v1740 = vunpack.c.l.b16 %v1700
      %v1741 = vunpack.c.l.b16 %v1701
      %v1742 = vpack.c.b16 %v1727, %v1726
      %v1743 = vpack.c.b16 %v1729, %v1728
      %v1744 = vpack.c.b16 %v1731, %v1730
      %v1745 = vpack.c.b16 %v1733, %v1732
      %v1746 = vpack.c.b16 %v1735, %v1734
      %v1747 = vpack.c.b16 %v1737, %v1736
      %v1748 = vpack.c.b16 %v1739, %v1738
      %v1749 = vpack.c.b16 %v1741, %v1740
      %1758 = vmatprep.subr.bf16.mxu0 0
      %1759 = vmatpush1.bf16.msra.mxu0 %v1742
      %1760 = vmatprep.subr.bf16.mxu0 0
      %1761 = vmatpush1.bf16.msra.mxu0 %v1743
      %1762 = vmatprep.subr.bf16.mxu0 0
      %1763 = vmatpush1.bf16.msra.mxu0 %v1744
      %1764 = vmatprep.subr.bf16.mxu0 0
      %1765 = vmatpush1.bf16.msra.mxu0 %v1745
      %1766 = vmatprep.subr.bf16.mxu0 0
      %1767 = vmatpush1.bf16.msra.mxu0 %v1746
      %1768 = vmatprep.subr.bf16.mxu0 0
      %1769 = vmatpush1.bf16.msra.mxu0 %v1747
      %1770 = vmatprep.subr.bf16.mxu0 0
      %1771 = vmatpush1.bf16.msra.mxu0 %v1748
      %1772 = vmatprep.subr.bf16.mxu0 0
      %1773 = vmatpush1.bf16.msra.mxu0 %v1749
      %1774 = vmatprep.subr.bf16.mxu0 0
      %1775 = vmatpush1.bf16.msra.mxu0 0
      %1776 = vmatprep.subr.bf16.mxu0 0
      %1777 = vmatpush1.bf16.msra.mxu0 0
      %1778 = vmatprep.subr.bf16.mxu0 0
      %1779 = vmatpush1.bf16.msra.mxu0 0
      %1780 = vmatprep.subr.bf16.mxu0 0
      %1781 = vmatpush1.bf16.msra.mxu0 0
      %1782 = vmatprep.subr.bf16.mxu0 0
      %1783 = vmatpush1.bf16.msra.mxu0 0
      %1784 = vmatprep.subr.bf16.mxu0 0
      %1785 = vmatpush1.bf16.msra.mxu0 0
      %1786 = vmatprep.subr.bf16.mxu0 0
      %1787 = vmatpush1.bf16.msra.mxu0 0
      %1788 = vmatprep.subr.bf16.mxu0 0
      %1789 = vmatpush1.bf16.msra.mxu0 0
      %1790 = vmatprep.mubr.bf16.mxu0 0
      %1791 = vmatmul.mubr.bf16.gmra.mrb[0].mxu0 %v1702
      %v1792 = vpop.f32.mrb[0].mxu0
      %v1793 = vadd.f32 %v1708, %v1792
      %v1794 = vpop.f32.mrb[0].mxu0
      %v1795 = vpop.f32.mrb[0].mxu0
      %v1796 = vadd.f32 %v1708, %v1795
      %v1797 = vpop.f32.mrb[0].mxu0
      %1798 = vdwg.mxu0
      %v1799 = vadd.f32 %v1554, %v1793
      %v1800 = vadd.f32 %v1555, %v1796
      %1801 = vst.msk [vmem:[#allocation2] sm:$0xff] %vm847, %v1799
      %1802 = vst.msk [vmem:[#allocation2 + $0x8] sm:$0xff] %vm847, %v1800
      %p1803 = scmp.eq.s32.totalorder %s33, 1
      // Predicated region
      $region93: #{vit_seg_forward.1} parent=87 // pred_check
        %p1804 = pneg %p1803
      $region94: #{vit_seg_forward.1} parent=87 // pred_check_branch
        %1806 = sbr.rel (%p1804) target = $region96
      $region95: #{vit_seg_forward.1} parent=87 // pred_region
        %v1807 = vld [vmem:[%s15] sm:$0xf]
        %v1808 = vld [vmem:[%s15 + $0x4] sm:$0xf]
        %v1809 = vld [vmem:[%s15 + $0x8] sm:$0xf]
        %v1810 = vld [vmem:[%s15 + $0xc] sm:$0xf]
        %v1811 = vpack.c.bf16 %v1800, %v1799
        %v1812 = vld [vmem:[%s16] sm:$0x1]
        %v1814 = vlaneseq
        %v1815 = vshrl.u32 %v1814, 7
        %v1816 = vsub.s32 0, %v1815
        %v1817 = vrot.slane %v1812, %v1816
        %v1823 = vunpack.c.l.b16 %v1807
        %v1824 = vunpack.c.l.b16 %v1808
        %v1825 = vunpack.c.l.b16 %v1809
        %v1826 = vunpack.c.l.b16 %v1810
        %v1827 = vpack.c.b16 %v1824, %v1823
        %v1828 = vpack.c.b16 %v1826, %v1825
        %v1832 = vsel %vm847, %v1811, 0
        %1834 = vmatprep.subr.bf16.mxu0 0
        %1835 = vmatpush1.bf16.msra.mxu0 %v1827
        %1836 = vmatprep.subr.bf16.mxu0 0
        %1837 = vmatpush1.bf16.msra.mxu0 %v1828
        %1838 = vmatprep.subr.bf16.mxu0 0
        %1839 = vmatpush1.bf16.msra.mxu0 0
        %1840 = vmatprep.subr.bf16.mxu0 0
        %1841 = vmatpush1.bf16.msra.mxu0 0
        %1842 = vmatprep.subr.bf16.mxu0 0
        %1843 = vmatpush1.bf16.msra.mxu0 0
        %1844 = vmatprep.subr.bf16.mxu0 0
        %1845 = vmatpush1.bf16.msra.mxu0 0
        %1846 = vmatprep.subr.bf16.mxu0 0
        %1847 = vmatpush1.bf16.msra.mxu0 0
        %1848 = vmatprep.subr.bf16.mxu0 0
        %1849 = vmatpush1.bf16.msra.mxu0 0
        %1850 = vmatprep.subr.bf16.mxu0 0
        %1851 = vmatpush1.bf16.msra.mxu0 0
        %1852 = vmatprep.subr.bf16.mxu0 0
        %1853 = vmatpush1.bf16.msra.mxu0 0
        %1854 = vmatprep.subr.bf16.mxu0 0
        %1855 = vmatpush1.bf16.msra.mxu0 0
        %1856 = vmatprep.subr.bf16.mxu0 0
        %1857 = vmatpush1.bf16.msra.mxu0 0
        %1858 = vmatprep.subr.bf16.mxu0 0
        %1859 = vmatpush1.bf16.msra.mxu0 0
        %1860 = vmatprep.subr.bf16.mxu0 0
        %1861 = vmatpush1.bf16.msra.mxu0 0
        %1862 = vmatprep.subr.bf16.mxu0 0
        %1863 = vmatpush1.bf16.msra.mxu0 0
        %1864 = vmatprep.subr.bf16.mxu0 0
        %1865 = vmatpush1.bf16.msra.mxu0 0
        %1866 = vmatprep.mubr.bf16.mxu0 0
        %1867 = vmatmul.mubr.bf16.gmra.mrb[0].mxu0 %v1832
        %v1868 = vpop.f32.mrb[0].mxu0
        %v1869 = vadd.f32 %v1817, %v1868
        %v1870 = vpop.f32.mrb[0].mxu0
        %v1871 = vpop.f32.mrb[0].mxu0
        %v1872 = vadd.f32 %v1817, %v1871
        %v1873 = vpop.f32.mrb[0].mxu0
        %1874 = vdwg.mxu0
        %vm1875 = vcmask 392192
        %1876 = vst.msk [vmem:[%s752] sm:$0xff] %vm1875, %v1869
        %1877 = vst.msk [vmem:[%s752 + $0x8] sm:$0xff] %vm1875, %v1872
      $region96: #{vit_seg_forward.1} parent=87 // pred_fallthru
        _
      %p1878 = scmp.lt.s32.totalorder %s32, 1
      %s1879 = scalar_select %p1878, %s32, 1
      %s1880 = smul.addr %s1879, 2
      %s1881 = smul.addr %s1880, 8
      %s1882 = scalar_lea.vmem %s17, %s1881
      // Predicated region
      $region97: #{vit_seg_forward.1} parent=87 // pred_check
        %p1883 = pneg %p480
      $region98: #{vit_seg_forward.1} parent=87 // pred_check_branch
        %1885 = sbr.rel (%p1883) target = $region100
      $region99: #{vit_seg_forward.1} parent=87 // pred_region
        _
      $region100: #{vit_seg_forward.1} parent=87 // pred_fallthru
        _
    $region88: #{vit_seg_forward.1} parent=5 // pred_fallthru
      _
    %p1886 = scmp.le.s32.totalorder 2, %s23
    // Predicated region
    $region101: #{vit_seg_forward.1} parent=5 // pred_check
      %p1887 = pneg %p1886
    $region102: #{vit_seg_forward.1} parent=5 // pred_check_branch
      %1889 = sbr.rel (%p1887) target = $region104
    $region103: #{vit_seg_forward.1} parent=5 // pred_region
      %s1890 = ssub.s32 %s23, 2
      // Predicated region
      $region105: #{vit_seg_forward.1} parent=103 // pred_check
        %p1891 = pneg %p486
      $region106: #{vit_seg_forward.1} parent=103 // pred_check_branch
        %1893 = sbr.rel (%p1891) target = $region108
      $region107: #{vit_seg_forward.1} parent=103 // pred_region
        %p1894 = scmp.lt.s32.totalorder %s34, 1
        %s1895 = scalar_select %p1894, %s34, 1
        %s1896 = smul.addr %s1895, 2
        %s1897 = smul.addr %s1896, 8
        %s1898 = scalar_lea.vmem %s17, %s1897
      $region108: #{vit_seg_forward.1} parent=103 // pred_fallthru
        _
    $region104: #{vit_seg_forward.1} parent=5 // pred_fallthru
      _
  $region6: #{vit_seg_forward.1} parent=0 // loop_footer
    %s27 = sadd.s32 1, %s23
  $region7: #{vit_seg_forward.1} parent=0 // loop_footer_branch
    %22 = sbr.rel target = $region3
  $region8: #{vit_seg_forward.1} parent=0 // loop_exit
    _

</llo_original>
